<compile_context>
chip_gen: v5e
topology: v5e:2x2
jax: 0.10.0
libtpu: 0.0.40
codegen_flags: <defaults>
</compile_context>

<pallas_src>
import functools

import jax
import jax.numpy as jnp
import numpy as np
from jax.experimental import pallas as pl
from jax.experimental.pallas import tpu as pltpu


def _round_up(x, m):
    return ((x + m - 1) // m) * m


def _vmem_capacity_bytes():
    """Physical VMEM per core (generation-aware), with a v7x-safe fallback."""
    try:
        info = pltpu.get_tpu_info()
        cap = getattr(info, "vmem_capacity_bytes", None)
        if cap:
            return int(cap)
    except Exception:
        pass
    return 64 * 1024 * 1024


def _sepconv_kernel(xc_ref, xh_ref, wdw_ref, b1_ref, wpw_ref, b2_ref, o_ref,
                    edge_ref, *, K, dilation, tile_h, halo, w_acc, w_out,
                    apply_relu):
    """One (batch, H-tile) step of the fused SepConv.

    xc_ref : (1, th, Wp, Cp)  f32   current input tile
    xh_ref : (1, HB, Wp, Cp)  f32   rows just below the tile (halo source)
    wdw_ref: (K*K, Cp)        f32   depthwise taps with BN1 scale folded in
    b1_ref : (1, Cp)          f32   BN1 shift
    wpw_ref: (Cp, Coutp)      bf16  pointwise weights with BN2 scale folded in
    b2_ref : (1, Coutp)       f32   BN2 shift
    o_ref  : (1, th, W_out, Coutp) f32
    edge_ref: (ER, Wp, Cp)    f32   scratch for the 2*halo boundary rows
    """
    th = tile_h
    d = dilation
    body_h = th - halo              # output rows whose window lies fully in xc
    cp = wpw_ref.shape[0]
    coutp = wpw_ref.shape[1]

    def process(load_win, nrows, row0):
        # ---- depthwise: K*K shifted windows, value accumulation ------------
        acc = None
        for kh in range(K):
            for kw in range(K):
                win = load_win(kh, kw).astype(jnp.float32)
                term = win * wdw_ref[kh * K + kw, :]     # BN1 scale pre-folded
                acc = term if acc is None else acc + term
        # ---- BN1 shift + ReLU ----------------------------------------------
        y = acc + b1_ref[0, :]
        if apply_relu:
            y = jnp.maximum(y, 0.0)                      # relu1
        # ---- pointwise 1x1 == MXU matmul (bf16 operands, f32 accumulate) ---
        z = jnp.dot(y.reshape(nrows * w_acc, cp).astype(jnp.bfloat16),
                    wpw_ref[...], preferred_element_type=jnp.float32)
        # ---- BN2 shift + ReLU, lane-dense store ------------------------------
        z = z + b2_ref[0, :]
        if apply_relu:
            z = jnp.maximum(z, 0.0)                      # relu2
        z = z.reshape(nrows, w_acc, coutp)
        o_ref[0, row0:row0 + nrows] = z[:, 0:w_out, :].astype(o_ref.dtype)

    # --- bulk rows: windows read straight from the current-tile block -------
    if body_h > 0:
        process(lambda kh, kw: xc_ref[0, kh * d:kh * d + body_h,
                                      kw * d:kw * d + w_acc, :],
                body_h, 0)

    # --- boundary rows: stage only the 2*halo rows straddling the next tile --
    if halo > 0:
        edge_ref[0:halo] = xc_ref[0, body_h:th, :, :].astype(jnp.float32)
        edge_ref[halo:2 * halo] = xh_ref[0, 0:halo, :, :].astype(jnp.float32)
        process(lambda kh, kw: edge_ref[kh * d:kh * d + halo,
                                        kw * d:kw * d + w_acc, :],
                halo, body_h)


def sepconv(x_nchw, params, *, kernel_size, stride, padding, dilation,
            activate_first=False, eps=1e-5, tile_h=None):
    """SepConv forward (eval-mode BN). x_nchw: (N, Cin, H, W) float32."""
    assert stride == 1, "only stride=1 supported"   # TODO(synk): stride > 1

    w_dw = params["w_dw"]          # (Cin, 1, K, K)  PyTorch depthwise layout
    w_pw = params["w_pw"]          # (Cout, Cin, 1, 1)
    N, Cin, H, W = x_nchw.shape
    Cout = w_pw.shape[0]
    K = kernel_size
    halo = dilation * (K - 1)

    H_out = H + 2 * padding - halo
    W_out = W + 2 * padding - halo
    assert H_out > 0 and W_out > 0

    # ---- lane-dense channel padding & sublane-aligned widths ----------------
    Cp = _round_up(Cin, 128)
    Coutp = _round_up(Cout, 128)
    W_acc = _round_up(W_out, 8)                 # accumulation width
    Wp = _round_up(W_acc + halo, 8)             # padded input width
    assert Wp >= W_acc + halo                   # window-slice invariant
    HB = max(8, _round_up(max(halo, 1), 8))     # halo-block height
    H_out_pad = _round_up(H_out, HB)
    ER = max(2 * halo, 8)                       # edge-staging scratch rows

    # ---- generation-aware VMEM sizing ----------------------------------------
    vmem_cap = _vmem_capacity_bytes()
    budget = min(int(0.55 * vmem_cap), 96 * 1024 * 1024)       # tile budget
    vmem_limit = max(min(int(0.75 * vmem_cap), 100 * 1024 * 1024),
                     32 * 1024 * 1024)

    def _vmem_est(t):
        f32, bf16 = 4, 2
        b = 2 * t * Wp * Cp * f32               # current-tile input (x2 bufs)
        b += 2 * HB * Wp * Cp * f32             # halo input blocks
        b += 2 * t * W_out * Coutp * f32        # output blocks
        b += 2 * t * W_acc * Cp * f32           # dw accumulator + window temps
        b += ER * Wp * Cp * f32                 # edge staging scratch
        b += t * W_acc * Cp * bf16              # bf16 matmul lhs
        b += t * W_acc * Coutp * f32            # matmul result
        b += 2 * (K * K * Cp * f32 + Cp * Coutp * bf16
                  + Cp * f32 + Coutp * f32)     # weights / BN shifts
        return b

    auto = tile_h is None
    th = H_out_pad if auto else _round_up(min(max(tile_h, HB), H_out_pad), HB)
    while th > HB and _vmem_est(th) > budget:   # biggest tile that fits VMEM
        th -= HB
    if auto:
        # keep >= ~8 grid steps so both v7x TensorCores get work and the
        # BlockSpec pipeline has depth; best effort, never below HB.
        min_steps = 8
        while th > HB and N * (-(-H_out // th)) < min_steps:
            th -= HB
    assert th >= halo and th % HB == 0

    n_h = -(-H_out // th)
    Hq = n_h * th                  # padded output height (multiple of th)
    Hin = Hq + HB                  # padded input height (covers tile + halo)
    halo_stride = th // HB

    # ---- fold BN to per-channel scale/shift and fold scales into weights ----
    def fold(gamma, beta, mean, var):
        scale = gamma / jnp.sqrt(var + eps)
        shift = beta - mean * scale
        return scale.astype(jnp.float32), shift.astype(jnp.float32)

    s1, b1 = fold(params["bn1_gamma"], params["bn1_beta"],
                  params["bn1_mean"], params["bn1_var"])
    s2, b2 = fold(params["bn2_gamma"], params["bn2_beta"],
                  params["bn2_mean"], params["bn2_var"])

    # depthwise taps (K*K, Cin) with BN1 scale folded in, padded to Cp lanes
    wdw = jnp.transpose(w_dw[:, 0, :, :], (1, 2, 0)).reshape(K * K, Cin)
    wdw = wdw.astype(jnp.float32) * s1[None, :]
    wdw = jnp.pad(wdw, ((0, 0), (0, Cp - Cin)))
    # pointwise (Cin, Cout) with BN2 scale folded in f32, then bf16 + padding
    wpw = jnp.transpose(w_pw[:, :, 0, 0], (1, 0)).astype(jnp.float32)
    wpw = wpw * s2[None, :]
    wpw = jnp.pad(wpw, ((0, Cp - Cin), (0, Coutp - Cout))).astype(jnp.bfloat16)
    b1_ = jnp.pad(b1, (0, Cp - Cin)).reshape(1, Cp)
    b2_ = jnp.pad(b2, (0, Coutp - Cout)).reshape(1, Coutp)

    # ---- NCHW -> NHWC, optional relu0, one combined pad (all one XLA pass) --
    x = jnp.transpose(x_nchw.astype(jnp.float32), (0, 2, 3, 1))
    if activate_first:
        x = jnp.maximum(x, 0.0)                 # relu0, fused with the pad pass
    x_pad = jnp.pad(x, ((0, 0),
                        (padding, Hin - padding - H),
                        (padding, Wp - padding - W),
                        (0, Cp - Cin)))

    kernel = functools.partial(
        _sepconv_kernel, K=K, dilation=dilation, tile_h=th, halo=halo,
        w_acc=W_acc, w_out=W_out, apply_relu=not activate_first)

    out = pl.pallas_call(
        kernel,
        out_shape=jax.ShapeDtypeStruct((N, Hq, W_out, Coutp), jnp.float32),
        grid_spec=pltpu.PrefetchScalarGridSpec(
            num_scalar_prefetch=0,
            grid=(N, n_h),
            in_specs=[
                # current H tile of the (padded) input
                pl.BlockSpec((1, th, Wp, Cp), lambda n, h: (n, h, 0, 0)),
                # halo rows just below the tile (second view of the same array)
                pl.BlockSpec((1, HB, Wp, Cp),
                             lambda n, h: (n, (h + 1) * halo_stride, 0, 0)),
                pl.BlockSpec((K * K, Cp), lambda n, h: (0, 0)),
                pl.BlockSpec((1, Cp), lambda n, h: (0, 0)),
                pl.BlockSpec((Cp, Coutp), lambda n, h: (0, 0)),
                pl.BlockSpec((1, Coutp), lambda n, h: (0, 0)),
            ],
            out_specs=pl.BlockSpec((1, th, W_out, Coutp),
                                   lambda n, h: (n, h, 0, 0)),
            scratch_shapes=[
                pltpu.VMEM((ER, Wp, Cp), jnp.float32),   # edge-row staging
            ]),
        compiler_params=pltpu.CompilerParams(
            dimension_semantics=("parallel", "parallel"),
            vmem_limit_bytes=vmem_limit),
    )(x_pad, x_pad, wdw, b1_, wpw, b2_)

    # strip tiling/channel padding, NHWC -> NCHW to match PyTorch convention.
    out = out[:, :H_out, :, :Cout]
    return jnp.transpose(out, (0, 3, 1, 2))


def _reference(x_nchw, params, *, kernel_size, stride, padding, dilation,
               activate_first=False, eps=1e-5):
    """Pure-JAX reference (NCHW, lax.conv) for correctness checking."""
    x = x_nchw.astype(jnp.float32)
    Cin = x.shape[1]
    if activate_first:
        x = jnp.maximum(x, 0.0)
    y = jax.lax.conv_general_dilated(
        x, params["w_dw"].astype(jnp.float32),
        window_strides=(stride, stride),
        padding=((padding, padding), (padding, padding)),
        rhs_dilation=(dilation, dilation),
        feature_group_count=Cin,
        dimension_numbers=("NCHW", "OIHW", "NCHW"))

    def bn(v, g, b, m, var):
        return (v - m[None, :, None, None]) / jnp.sqrt(var + eps)[None, :, None, None] \
               * g[None, :, None, None] + b[None, :, None, None]

    y = bn(y, params["bn1_gamma"], params["bn1_beta"],
           params["bn1_mean"], params["bn1_var"])
    if not activate_first:
        y = jnp.maximum(y, 0.0)
    z = jax.lax.conv_general_dilated(
        y, params["w_pw"].astype(jnp.float32),
        window_strides=(1, 1), padding="VALID",
        dimension_numbers=("NCHW", "OIHW", "NCHW"))
    z = bn(z, params["bn2_gamma"], params["bn2_beta"],
           params["bn2_mean"], params["bn2_var"])
    if not activate_first:
        z = jnp.maximum(z, 0.0)
    return z


def make_params(key, in_channels, out_channels, kernel_size):
    ks = jax.random.split(key, 8)
    return {
        "w_dw": 0.1 * jax.random.normal(
            ks[0], (in_channels, 1, kernel_size, kernel_size), jnp.float32),
        "w_pw": 0.1 * jax.random.normal(
            ks[1], (out_channels, in_channels, 1, 1), jnp.float32),
        "bn1_gamma": 1.0 + 0.05 * jax.random.normal(ks[2], (in_channels,)),
        "bn1_beta": 0.05 * jax.random.normal(ks[3], (in_channels,)),
        "bn1_mean": 0.05 * jax.random.normal(ks[4], (in_channels,)),
        "bn1_var": jnp.abs(1.0 + 0.05 * jax.random.normal(ks[5], (in_channels,))),
        "bn2_gamma": 1.0 + 0.05 * jax.random.normal(ks[6], (out_channels,)),
        "bn2_beta": 0.05 * jax.random.normal(ks[7], (out_channels,)),
        "bn2_mean": jnp.zeros((out_channels,), jnp.float32),
        "bn2_var": jnp.ones((out_channels,), jnp.float32),
    }


if __name__ == "__main__":
    key = jax.random.PRNGKey(0)
    kx, kp1, kp2 = jax.random.split(key, 3)

    N, Cin, H, W = 2, 8, 16, 16
    Cout, K = 16, 3
    x = jax.random.normal(kx, (N, Cin, H, W), jnp.float32)

    # Config A: SepConv(8->16, k=3, s=1, pad=1, dil=1), eval BN,
    # activate_first=False; tile_h=8 forces the 2-tile H path + halo staging.
    params_a = make_params(kp1, Cin, Cout, K)
    out_a = sepconv(x, params_a, kernel_size=K, stride=1, padding=1, dilation=1,
                    activate_first=False, tile_h=8)
    out_a = jax.block_until_ready(out_a)
    ref_a = _reference(x, params_a, kernel_size=K, stride=1, padding=1,
                       dilation=1, activate_first=False)
    # bf16 MXU operands => slightly looser tolerance than a pure-f32 matmul.
    np.testing.assert_allclose(np.asarray(out_a), np.asarray(ref_a),
                               rtol=3e-2, atol=3e-2)

    # Config B: dilated SepConv (pad=2, dil=2), activate_first=True, auto tiling.
    params_b = make_params(kp2, Cin, Cout, K)
    out_b = sepconv(x, params_b, kernel_size=K, stride=1, padding=2, dilation=2,
                    activate_first=True, tile_h=None)
    out_b = jax.block_until_ready(out_b)
    ref_b = _reference(x, params_b, kernel_size=K, stride=1, padding=2,
                       dilation=2, activate_first=True)
    np.testing.assert_allclose(np.asarray(out_b), np.asarray(ref_b),
                               rtol=3e-2, atol=3e-2)

    print("KERNEL_OK")
</pallas_src>

<mosaic_0001>
module attributes {stable_mosaic.version = 11 : i64} {
  func.func @_sepconv_kernel(%arg0: i32, %arg1: i32, %arg2: memref<1x8x24x128xf32, #tpu.memory_space<vmem>>, %arg3: memref<1x8x24x128xf32, #tpu.memory_space<vmem>>, %arg4: memref<9x128xf32, #tpu.memory_space<vmem>>, %arg5: memref<1x128xf32, #tpu.memory_space<vmem>>, %arg6: memref<128x128xbf16, #tpu.memory_space<vmem>>, %arg7: memref<1x128xf32, #tpu.memory_space<vmem>>, %arg8: memref<1x8x16x128xf32, #tpu.memory_space<vmem>>, %arg9: memref<8x24x128xf32, #tpu.memory_space<vmem>>) attributes {dimension_semantics = [#tpu.dimension_semantics<parallel>, #tpu.dimension_semantics<parallel>], iteration_bounds = array<i64: 2, 2>, scalar_prefetch = 0 : i64, scratch_operands = 1 : i64, tpu.core_type = #tpu.core_type<tc>, window_params = [{transform_indices = @transform_0, window_bounds = array<i64: 1, 8, 24, 128>}, {transform_indices = @transform_1, window_bounds = array<i64: 1, 8, 24, 128>}, {pipeline_mode = #tpu.pipeline_mode<synchronous>, transform_indices = @transform_2, window_bounds = array<i64: 9, 128>}, {pipeline_mode = #tpu.pipeline_mode<synchronous>, transform_indices = @transform_3, window_bounds = array<i64: 1, 128>}, {pipeline_mode = #tpu.pipeline_mode<synchronous>, transform_indices = @transform_4, window_bounds = array<i64: 128, 128>}, {pipeline_mode = #tpu.pipeline_mode<synchronous>, transform_indices = @transform_5, window_bounds = array<i64: 1, 128>}, {transform_indices = @transform_6, window_bounds = array<i64: 1, 8, 16, 128>}]} {
    %c0 = arith.constant 0 : index
    %c0_0 = arith.constant 0 : index
    %c0_1 = arith.constant 0 : index
    %c0_2 = arith.constant 0 : index
    %0 = vector.load %arg2[%c0, %c0_0, %c0_1, %c0_2] : memref<1x8x24x128xf32, #tpu.memory_space<vmem>>, vector<1x6x16x128xf32>
    %1 = vector.shape_cast %0 : vector<1x6x16x128xf32> to vector<6x16x128xf32>
    %c0_3 = arith.constant 0 : index
    %c0_4 = arith.constant 0 : index
    %2 = vector.load %arg4[%c0_3, %c0_4] : memref<9x128xf32, #tpu.memory_space<vmem>>, vector<1x128xf32>
    %3 = vector.shape_cast %2 : vector<1x128xf32> to vector<128xf32>
    %4 = vector.shape_cast %3 : vector<128xf32> to vector<1x1x128xf32>
    %5 = vector.broadcast %4 : vector<1x1x128xf32> to vector<6x16x128xf32>
    %6 = arith.mulf %1, %5 : vector<6x16x128xf32>
    %c0_5 = arith.constant 0 : index
    %c0_6 = arith.constant 0 : index
    %c1 = arith.constant 1 : index
    %c0_7 = arith.constant 0 : index
    %7 = vector.load %arg2[%c0_5, %c0_6, %c1, %c0_7] : memref<1x8x24x128xf32, #tpu.memory_space<vmem>>, vector<1x6x16x128xf32>
    %8 = vector.shape_cast %7 : vector<1x6x16x128xf32> to vector<6x16x128xf32>
    %c1_8 = arith.constant 1 : index
    %c0_9 = arith.constant 0 : index
    %9 = vector.load %arg4[%c1_8, %c0_9] : memref<9x128xf32, #tpu.memory_space<vmem>>, vector<1x128xf32>
    %10 = vector.shape_cast %9 : vector<1x128xf32> to vector<128xf32>
    %11 = vector.shape_cast %10 : vector<128xf32> to vector<1x1x128xf32>
    %12 = vector.broadcast %11 : vector<1x1x128xf32> to vector<6x16x128xf32>
    %13 = arith.mulf %8, %12 : vector<6x16x128xf32>
    %14 = arith.addf %6, %13 : vector<6x16x128xf32>
    %c0_10 = arith.constant 0 : index
    %c0_11 = arith.constant 0 : index
    %c2 = arith.constant 2 : index
    %c0_12 = arith.constant 0 : index
    %15 = vector.load %arg2[%c0_10, %c0_11, %c2, %c0_12] : memref<1x8x24x128xf32, #tpu.memory_space<vmem>>, vector<1x6x16x128xf32>
    %16 = vector.shape_cast %15 : vector<1x6x16x128xf32> to vector<6x16x128xf32>
    %c2_13 = arith.constant 2 : index
    %c0_14 = arith.constant 0 : index
    %17 = vector.load %arg4[%c2_13, %c0_14] : memref<9x128xf32, #tpu.memory_space<vmem>>, vector<1x128xf32>
    %18 = vector.shape_cast %17 : vector<1x128xf32> to vector<128xf32>
    %19 = vector.shape_cast %18 : vector<128xf32> to vector<1x1x128xf32>
    %20 = vector.broadcast %19 : vector<1x1x128xf32> to vector<6x16x128xf32>
    %21 = arith.mulf %16, %20 : vector<6x16x128xf32>
    %22 = arith.addf %14, %21 : vector<6x16x128xf32>
    %c0_15 = arith.constant 0 : index
    %c1_16 = arith.constant 1 : index
    %c0_17 = arith.constant 0 : index
    %c0_18 = arith.constant 0 : index
    %23 = vector.load %arg2[%c0_15, %c1_16, %c0_17, %c0_18] : memref<1x8x24x128xf32, #tpu.memory_space<vmem>>, vector<1x6x16x128xf32>
    %24 = vector.shape_cast %23 : vector<1x6x16x128xf32> to vector<6x16x128xf32>
    %c3 = arith.constant 3 : index
    %c0_19 = arith.constant 0 : index
    %25 = vector.load %arg4[%c3, %c0_19] : memref<9x128xf32, #tpu.memory_space<vmem>>, vector<1x128xf32>
    %26 = vector.shape_cast %25 : vector<1x128xf32> to vector<128xf32>
    %27 = vector.shape_cast %26 : vector<128xf32> to vector<1x1x128xf32>
    %28 = vector.broadcast %27 : vector<1x1x128xf32> to vector<6x16x128xf32>
    %29 = arith.mulf %24, %28 : vector<6x16x128xf32>
    %30 = arith.addf %22, %29 : vector<6x16x128xf32>
    %c0_20 = arith.constant 0 : index
    %c1_21 = arith.constant 1 : index
    %c1_22 = arith.constant 1 : index
    %c0_23 = arith.constant 0 : index
    %31 = vector.load %arg2[%c0_20, %c1_21, %c1_22, %c0_23] : memref<1x8x24x128xf32, #tpu.memory_space<vmem>>, vector<1x6x16x128xf32>
    %32 = vector.shape_cast %31 : vector<1x6x16x128xf32> to vector<6x16x128xf32>
    %c4 = arith.constant 4 : index
    %c0_24 = arith.constant 0 : index
    %33 = vector.load %arg4[%c4, %c0_24] : memref<9x128xf32, #tpu.memory_space<vmem>>, vector<1x128xf32>
    %34 = vector.shape_cast %33 : vector<1x128xf32> to vector<128xf32>
    %35 = vector.shape_cast %34 : vector<128xf32> to vector<1x1x128xf32>
    %36 = vector.broadcast %35 : vector<1x1x128xf32> to vector<6x16x128xf32>
    %37 = arith.mulf %32, %36 : vector<6x16x128xf32>
    %38 = arith.addf %30, %37 : vector<6x16x128xf32>
    %c0_25 = arith.constant 0 : index
    %c1_26 = arith.constant 1 : index
    %c2_27 = arith.constant 2 : index
    %c0_28 = arith.constant 0 : index
    %39 = vector.load %arg2[%c0_25, %c1_26, %c2_27, %c0_28] : memref<1x8x24x128xf32, #tpu.memory_space<vmem>>, vector<1x6x16x128xf32>
    %40 = vector.shape_cast %39 : vector<1x6x16x128xf32> to vector<6x16x128xf32>
    %c5 = arith.constant 5 : index
    %c0_29 = arith.constant 0 : index
    %41 = vector.load %arg4[%c5, %c0_29] : memref<9x128xf32, #tpu.memory_space<vmem>>, vector<1x128xf32>
    %42 = vector.shape_cast %41 : vector<1x128xf32> to vector<128xf32>
    %43 = vector.shape_cast %42 : vector<128xf32> to vector<1x1x128xf32>
    %44 = vector.broadcast %43 : vector<1x1x128xf32> to vector<6x16x128xf32>
    %45 = arith.mulf %40, %44 : vector<6x16x128xf32>
    %46 = arith.addf %38, %45 : vector<6x16x128xf32>
    %c0_30 = arith.constant 0 : index
    %c2_31 = arith.constant 2 : index
    %c0_32 = arith.constant 0 : index
    %c0_33 = arith.constant 0 : index
    %47 = vector.load %arg2[%c0_30, %c2_31, %c0_32, %c0_33] : memref<1x8x24x128xf32, #tpu.memory_space<vmem>>, vector<1x6x16x128xf32>
    %48 = vector.shape_cast %47 : vector<1x6x16x128xf32> to vector<6x16x128xf32>
    %c6 = arith.constant 6 : index
    %c0_34 = arith.constant 0 : index
    %49 = vector.load %arg4[%c6, %c0_34] : memref<9x128xf32, #tpu.memory_space<vmem>>, vector<1x128xf32>
    %50 = vector.shape_cast %49 : vector<1x128xf32> to vector<128xf32>
    %51 = vector.shape_cast %50 : vector<128xf32> to vector<1x1x128xf32>
    %52 = vector.broadcast %51 : vector<1x1x128xf32> to vector<6x16x128xf32>
    %53 = arith.mulf %48, %52 : vector<6x16x128xf32>
    %54 = arith.addf %46, %53 : vector<6x16x128xf32>
    %c0_35 = arith.constant 0 : index
    %c2_36 = arith.constant 2 : index
    %c1_37 = arith.constant 1 : index
    %c0_38 = arith.constant 0 : index
    %55 = vector.load %arg2[%c0_35, %c2_36, %c1_37, %c0_38] : memref<1x8x24x128xf32, #tpu.memory_space<vmem>>, vector<1x6x16x128xf32>
    %56 = vector.shape_cast %55 : vector<1x6x16x128xf32> to vector<6x16x128xf32>
    %c7 = arith.constant 7 : index
    %c0_39 = arith.constant 0 : index
    %57 = vector.load %arg4[%c7, %c0_39] : memref<9x128xf32, #tpu.memory_space<vmem>>, vector<1x128xf32>
    %58 = vector.shape_cast %57 : vector<1x128xf32> to vector<128xf32>
    %59 = vector.shape_cast %58 : vector<128xf32> to vector<1x1x128xf32>
    %60 = vector.broadcast %59 : vector<1x1x128xf32> to vector<6x16x128xf32>
    %61 = arith.mulf %56, %60 : vector<6x16x128xf32>
    %62 = arith.addf %54, %61 : vector<6x16x128xf32>
    %c0_40 = arith.constant 0 : index
    %c2_41 = arith.constant 2 : index
    %c2_42 = arith.constant 2 : index
    %c0_43 = arith.constant 0 : index
    %63 = vector.load %arg2[%c0_40, %c2_41, %c2_42, %c0_43] : memref<1x8x24x128xf32, #tpu.memory_space<vmem>>, vector<1x6x16x128xf32>
    %64 = vector.shape_cast %63 : vector<1x6x16x128xf32> to vector<6x16x128xf32>
    %c8 = arith.constant 8 : index
    %c0_44 = arith.constant 0 : index
    %65 = vector.load %arg4[%c8, %c0_44] : memref<9x128xf32, #tpu.memory_space<vmem>>, vector<1x128xf32>
    %66 = vector.shape_cast %65 : vector<1x128xf32> to vector<128xf32>
    %67 = vector.shape_cast %66 : vector<128xf32> to vector<1x1x128xf32>
    %68 = vector.broadcast %67 : vector<1x1x128xf32> to vector<6x16x128xf32>
    %69 = arith.mulf %64, %68 : vector<6x16x128xf32>
    %70 = arith.addf %62, %69 : vector<6x16x128xf32>
    %c0_45 = arith.constant 0 : index
    %c0_46 = arith.constant 0 : index
    %71 = vector.load %arg5[%c0_45, %c0_46] : memref<1x128xf32, #tpu.memory_space<vmem>>, vector<1x128xf32>
    %72 = vector.shape_cast %71 : vector<1x128xf32> to vector<128xf32>
    %73 = vector.shape_cast %72 : vector<128xf32> to vector<1x1x128xf32>
    %74 = vector.broadcast %73 : vector<1x1x128xf32> to vector<6x16x128xf32>
    %75 = arith.addf %70, %74 : vector<6x16x128xf32>
    %cst = arith.constant 0.000000e+00 : f32
    %76 = vector.broadcast %cst : f32 to vector<6x16x128xf32>
    %77 = arith.maximumf %75, %76 : vector<6x16x128xf32>
    %78 = vector.shape_cast %77 : vector<6x16x128xf32> to vector<96x128xf32>
    %79 = arith.truncf %78 : vector<96x128xf32> to vector<96x128xbf16>
    %c0_47 = arith.constant 0 : index
    %c0_48 = arith.constant 0 : index
    %80 = vector.load %arg6[%c0_47, %c0_48] : memref<128x128xbf16, #tpu.memory_space<vmem>>, vector<128x128xbf16>
    %cst_49 = arith.constant dense<0.000000e+00> : vector<96x128xf32>
    %81 = tpu.matmul %79, %80, %cst_49 {dimension_numbers = #tpu.dot_dimension_numbers<[1], [0], [0], [1], [0, 0, 1, 1], [], []>} : vector<96x128xbf16>, vector<128x128xbf16>, vector<96x128xf32> -> vector<96x128xf32>
    %c0_50 = arith.constant 0 : index
    %c0_51 = arith.constant 0 : index
    %82 = vector.load %arg7[%c0_50, %c0_51] : memref<1x128xf32, #tpu.memory_space<vmem>>, vector<1x128xf32>
    %83 = vector.shape_cast %82 : vector<1x128xf32> to vector<128xf32>
    %84 = vector.shape_cast %83 : vector<128xf32> to vector<1x128xf32>
    %85 = vector.broadcast %84 : vector<1x128xf32> to vector<96x128xf32>
    %86 = arith.addf %81, %85 : vector<96x128xf32>
    %cst_52 = arith.constant 0.000000e+00 : f32
    %87 = vector.broadcast %cst_52 : f32 to vector<96x128xf32>
    %88 = arith.maximumf %86, %87 : vector<96x128xf32>
    %89 = vector.shape_cast %88 : vector<96x128xf32> to vector<6x16x128xf32>
    %c0_53 = arith.constant 0 : index
    %c0_54 = arith.constant 0 : index
    %c0_55 = arith.constant 0 : index
    %c0_56 = arith.constant 0 : index
    %90 = vector.load %arg8[%c0_53, %c0_54, %c0_55, %c0_56] : memref<1x8x16x128xf32, #tpu.memory_space<vmem>>, vector<1x6x16x128xf32>
    %91 = vector.shape_cast %90 : vector<1x6x16x128xf32> to vector<6x16x128xf32>
    %92 = vector.shape_cast %89 : vector<6x16x128xf32> to vector<1x6x16x128xf32>
    tpu.vector_store %arg8[%c0_53, %c0_54, %c0_55, %c0_56], %92 {strides = array<i32>} : memref<1x8x16x128xf32, #tpu.memory_space<vmem>>, vector<1x6x16x128xf32>,
    %c0_57 = arith.constant 0 : index
    %c6_58 = arith.constant 6 : index
    %c0_59 = arith.constant 0 : index
    %c0_60 = arith.constant 0 : index
    %93 = vector.load %arg2[%c0_57, %c6_58, %c0_59, %c0_60] : memref<1x8x24x128xf32, #tpu.memory_space<vmem>>, vector<1x2x24x128xf32>
    %94 = vector.shape_cast %93 : vector<1x2x24x128xf32> to vector<2x24x128xf32>
    %c0_61 = arith.constant 0 : index
    %c0_62 = arith.constant 0 : index
    %c0_63 = arith.constant 0 : index
    %95 = vector.load %arg9[%c0_61, %c0_62, %c0_63] : memref<8x24x128xf32, #tpu.memory_space<vmem>>, vector<2x24x128xf32>
    tpu.vector_store %arg9[%c0_61, %c0_62, %c0_63], %94 {strides = array<i32>} : memref<8x24x128xf32, #tpu.memory_space<vmem>>, vector<2x24x128xf32>,
    %c0_64 = arith.constant 0 : index
    %c0_65 = arith.constant 0 : index
    %c0_66 = arith.constant 0 : index
    %c0_67 = arith.constant 0 : index
    %96 = vector.load %arg3[%c0_64, %c0_65, %c0_66, %c0_67] : memref<1x8x24x128xf32, #tpu.memory_space<vmem>>, vector<1x2x24x128xf32>
    %97 = vector.shape_cast %96 : vector<1x2x24x128xf32> to vector<2x24x128xf32>
    %c2_68 = arith.constant 2 : index
    %c0_69 = arith.constant 0 : index
    %c0_70 = arith.constant 0 : index
    %98 = vector.load %arg9[%c2_68, %c0_69, %c0_70] : memref<8x24x128xf32, #tpu.memory_space<vmem>>, vector<2x24x128xf32>
    tpu.vector_store %arg9[%c2_68, %c0_69, %c0_70], %97 {strides = array<i32>} : memref<8x24x128xf32, #tpu.memory_space<vmem>>, vector<2x24x128xf32>,
    %c0_71 = arith.constant 0 : index
    %c0_72 = arith.constant 0 : index
    %c0_73 = arith.constant 0 : index
    %99 = vector.load %arg9[%c0_71, %c0_72, %c0_73] : memref<8x24x128xf32, #tpu.memory_space<vmem>>, vector<2x16x128xf32>
    %c0_74 = arith.constant 0 : index
    %c0_75 = arith.constant 0 : index
    %100 = vector.load %arg4[%c0_74, %c0_75] : memref<9x128xf32, #tpu.memory_space<vmem>>, vector<1x128xf32>
    %101 = vector.shape_cast %100 : vector<1x128xf32> to vector<128xf32>
    %102 = vector.shape_cast %101 : vector<128xf32> to vector<1x1x128xf32>
    %103 = vector.broadcast %102 : vector<1x1x128xf32> to vector<2x16x128xf32>
    %104 = arith.mulf %99, %103 : vector<2x16x128xf32>
    %c0_76 = arith.constant 0 : index
    %c1_77 = arith.constant 1 : index
    %c0_78 = arith.constant 0 : index
    %105 = vector.load %arg9[%c0_76, %c1_77, %c0_78] : memref<8x24x128xf32, #tpu.memory_space<vmem>>, vector<2x16x128xf32>
    %c1_79 = arith.constant 1 : index
    %c0_80 = arith.constant 0 : index
    %106 = vector.load %arg4[%c1_79, %c0_80] : memref<9x128xf32, #tpu.memory_space<vmem>>, vector<1x128xf32>
    %107 = vector.shape_cast %106 : vector<1x128xf32> to vector<128xf32>
    %108 = vector.shape_cast %107 : vector<128xf32> to vector<1x1x128xf32>
    %109 = vector.broadcast %108 : vector<1x1x128xf32> to vector<2x16x128xf32>
    %110 = arith.mulf %105, %109 : vector<2x16x128xf32>
    %111 = arith.addf %104, %110 : vector<2x16x128xf32>
    %c0_81 = arith.constant 0 : index
    %c2_82 = arith.constant 2 : index
    %c0_83 = arith.constant 0 : index
    %112 = vector.load %arg9[%c0_81, %c2_82, %c0_83] : memref<8x24x128xf32, #tpu.memory_space<vmem>>, vector<2x16x128xf32>
    %c2_84 = arith.constant 2 : index
    %c0_85 = arith.constant 0 : index
    %113 = vector.load %arg4[%c2_84, %c0_85] : memref<9x128xf32, #tpu.memory_space<vmem>>, vector<1x128xf32>
    %114 = vector.shape_cast %113 : vector<1x128xf32> to vector<128xf32>
    %115 = vector.shape_cast %114 : vector<128xf32> to vector<1x1x128xf32>
    %116 = vector.broadcast %115 : vector<1x1x128xf32> to vector<2x16x128xf32>
    %117 = arith.mulf %112, %116 : vector<2x16x128xf32>
    %118 = arith.addf %111, %117 : vector<2x16x128xf32>
    %c1_86 = arith.constant 1 : index
    %c0_87 = arith.constant 0 : index
    %c0_88 = arith.constant 0 : index
    %119 = vector.load %arg9[%c1_86, %c0_87, %c0_88] : memref<8x24x128xf32, #tpu.memory_space<vmem>>, vector<2x16x128xf32>
    %c3_89 = arith.constant 3 : index
    %c0_90 = arith.constant 0 : index
    %120 = vector.load %arg4[%c3_89, %c0_90] : memref<9x128xf32, #tpu.memory_space<vmem>>, vector<1x128xf32>
    %121 = vector.shape_cast %120 : vector<1x128xf32> to vector<128xf32>
    %122 = vector.shape_cast %121 : vector<128xf32> to vector<1x1x128xf32>
    %123 = vector.broadcast %122 : vector<1x1x128xf32> to vector<2x16x128xf32>
    %124 = arith.mulf %119, %123 : vector<2x16x128xf32>
    %125 = arith.addf %118, %124 : vector<2x16x128xf32>
    %c1_91 = arith.constant 1 : index
    %c1_92 = arith.constant 1 : index
    %c0_93 = arith.constant 0 : index
    %126 = vector.load %arg9[%c1_91, %c1_92, %c0_93] : memref<8x24x128xf32, #tpu.memory_space<vmem>>, vector<2x16x128xf32>
    %c4_94 = arith.constant 4 : index
    %c0_95 = arith.constant 0 : index
    %127 = vector.load %arg4[%c4_94, %c0_95] : memref<9x128xf32, #tpu.memory_space<vmem>>, vector<1x128xf32>
    %128 = vector.shape_cast %127 : vector<1x128xf32> to vector<128xf32>
    %129 = vector.shape_cast %128 : vector<128xf32> to vector<1x1x128xf32>
    %130 = vector.broadcast %129 : vector<1x1x128xf32> to vector<2x16x128xf32>
    %131 = arith.mulf %126, %130 : vector<2x16x128xf32>
    %132 = arith.addf %125, %131 : vector<2x16x128xf32>
    %c1_96 = arith.constant 1 : index
    %c2_97 = arith.constant 2 : index
    %c0_98 = arith.constant 0 : index
    %133 = vector.load %arg9[%c1_96, %c2_97, %c0_98] : memref<8x24x128xf32, #tpu.memory_space<vmem>>, vector<2x16x128xf32>
    %c5_99 = arith.constant 5 : index
    %c0_100 = arith.constant 0 : index
    %134 = vector.load %arg4[%c5_99, %c0_100] : memref<9x128xf32, #tpu.memory_space<vmem>>, vector<1x128xf32>
    %135 = vector.shape_cast %134 : vector<1x128xf32> to vector<128xf32>
    %136 = vector.shape_cast %135 : vector<128xf32> to vector<1x1x128xf32>
    %137 = vector.broadcast %136 : vector<1x1x128xf32> to vector<2x16x128xf32>
    %138 = arith.mulf %133, %137 : vector<2x16x128xf32>
    %139 = arith.addf %132, %138 : vector<2x16x128xf32>
    %c2_101 = arith.constant 2 : index
    %c0_102 = arith.constant 0 : index
    %c0_103 = arith.constant 0 : index
    %140 = vector.load %arg9[%c2_101, %c0_102, %c0_103] : memref<8x24x128xf32, #tpu.memory_space<vmem>>, vector<2x16x128xf32>
    %c6_104 = arith.constant 6 : index
    %c0_105 = arith.constant 0 : index
    %141 = vector.load %arg4[%c6_104, %c0_105] : memref<9x128xf32, #tpu.memory_space<vmem>>, vector<1x128xf32>
    %142 = vector.shape_cast %141 : vector<1x128xf32> to vector<128xf32>
    %143 = vector.shape_cast %142 : vector<128xf32> to vector<1x1x128xf32>
    %144 = vector.broadcast %143 : vector<1x1x128xf32> to vector<2x16x128xf32>
    %145 = arith.mulf %140, %144 : vector<2x16x128xf32>
    %146 = arith.addf %139, %145 : vector<2x16x128xf32>
    %c2_106 = arith.constant 2 : index
    %c1_107 = arith.constant 1 : index
    %c0_108 = arith.constant 0 : index
    %147 = vector.load %arg9[%c2_106, %c1_107, %c0_108] : memref<8x24x128xf32, #tpu.memory_space<vmem>>, vector<2x16x128xf32>
    %c7_109 = arith.constant 7 : index
    %c0_110 = arith.constant 0 : index
    %148 = vector.load %arg4[%c7_109, %c0_110] : memref<9x128xf32, #tpu.memory_space<vmem>>, vector<1x128xf32>
    %149 = vector.shape_cast %148 : vector<1x128xf32> to vector<128xf32>
    %150 = vector.shape_cast %149 : vector<128xf32> to vector<1x1x128xf32>
    %151 = vector.broadcast %150 : vector<1x1x128xf32> to vector<2x16x128xf32>
    %152 = arith.mulf %147, %151 : vector<2x16x128xf32>
    %153 = arith.addf %146, %152 : vector<2x16x128xf32>
    %c2_111 = arith.constant 2 : index
    %c2_112 = arith.constant 2 : index
    %c0_113 = arith.constant 0 : index
    %154 = vector.load %arg9[%c2_111, %c2_112, %c0_113] : memref<8x24x128xf32, #tpu.memory_space<vmem>>, vector<2x16x128xf32>
    %c8_114 = arith.constant 8 : index
    %c0_115 = arith.constant 0 : index
    %155 = vector.load %arg4[%c8_114, %c0_115] : memref<9x128xf32, #tpu.memory_space<vmem>>, vector<1x128xf32>
    %156 = vector.shape_cast %155 : vector<1x128xf32> to vector<128xf32>
    %157 = vector.shape_cast %156 : vector<128xf32> to vector<1x1x128xf32>
    %158 = vector.broadcast %157 : vector<1x1x128xf32> to vector<2x16x128xf32>
    %159 = arith.mulf %154, %158 : vector<2x16x128xf32>
    %160 = arith.addf %153, %159 : vector<2x16x128xf32>
    %c0_116 = arith.constant 0 : index
    %c0_117 = arith.constant 0 : index
    %161 = vector.load %arg5[%c0_116, %c0_117] : memref<1x128xf32, #tpu.memory_space<vmem>>, vector<1x128xf32>
    %162 = vector.shape_cast %161 : vector<1x128xf32> to vector<128xf32>
    %163 = vector.shape_cast %162 : vector<128xf32> to vector<1x1x128xf32>
    %164 = vector.broadcast %163 : vector<1x1x128xf32> to vector<2x16x128xf32>
    %165 = arith.addf %160, %164 : vector<2x16x128xf32>
    %cst_118 = arith.constant 0.000000e+00 : f32
    %166 = vector.broadcast %cst_118 : f32 to vector<2x16x128xf32>
    %167 = arith.maximumf %165, %166 : vector<2x16x128xf32>
    %168 = vector.shape_cast %167 : vector<2x16x128xf32> to vector<32x128xf32>
    %169 = arith.truncf %168 : vector<32x128xf32> to vector<32x128xbf16>
    %c0_119 = arith.constant 0 : index
    %c0_120 = arith.constant 0 : index
    %170 = vector.load %arg6[%c0_119, %c0_120] : memref<128x128xbf16, #tpu.memory_space<vmem>>, vector<128x128xbf16>
    %cst_121 = arith.constant dense<0.000000e+00> : vector<32x128xf32>
    %171 = tpu.matmul %169, %170, %cst_121 {dimension_numbers = #tpu.dot_dimension_numbers<[1], [0], [0], [1], [0, 0, 1, 1], [], []>} : vector<32x128xbf16>, vector<128x128xbf16>, vector<32x128xf32> -> vector<32x128xf32>
    %c0_122 = arith.constant 0 : index
    %c0_123 = arith.constant 0 : index
    %172 = vector.load %arg7[%c0_122, %c0_123] : memref<1x128xf32, #tpu.memory_space<vmem>>, vector<1x128xf32>
    %173 = vector.shape_cast %172 : vector<1x128xf32> to vector<128xf32>
    %174 = vector.shape_cast %173 : vector<128xf32> to vector<1x128xf32>
    %175 = vector.broadcast %174 : vector<1x128xf32> to vector<32x128xf32>
    %176 = arith.addf %171, %175 : vector<32x128xf32>
    %cst_124 = arith.constant 0.000000e+00 : f32
    %177 = vector.broadcast %cst_124 : f32 to vector<32x128xf32>
    %178 = arith.maximumf %176, %177 : vector<32x128xf32>
    %179 = vector.shape_cast %178 : vector<32x128xf32> to vector<2x16x128xf32>
    %c0_125 = arith.constant 0 : index
    %c6_126 = arith.constant 6 : index
    %c0_127 = arith.constant 0 : index
    %c0_128 = arith.constant 0 : index
    %180 = vector.load %arg8[%c0_125, %c6_126, %c0_127, %c0_128] : memref<1x8x16x128xf32, #tpu.memory_space<vmem>>, vector<1x2x16x128xf32>
    %181 = vector.shape_cast %180 : vector<1x2x16x128xf32> to vector<2x16x128xf32>
    %182 = vector.shape_cast %179 : vector<2x16x128xf32> to vector<1x2x16x128xf32>
    tpu.vector_store %arg8[%c0_125, %c6_126, %c0_127, %c0_128], %182 {strides = array<i32>} : memref<1x8x16x128xf32, #tpu.memory_space<vmem>>, vector<1x2x16x128xf32>,
    return
  }
  func.func @transform_0(%arg0: i32, %arg1: i32) -> (i32, i32, i32, i32) {
    %c0_i32 = arith.constant 0 : i32
    %c0_i32_0 = arith.constant 0 : i32
    %c0_i32_1 = arith.constant 0 : i32
    return %arg0, %arg1, %c0_i32, %c0_i32_0 : i32, i32, i32, i32
  }
  func.func @transform_1(%arg0: i32, %arg1: i32) -> (i32, i32, i32, i32) {
    %c1_i32 = arith.constant 1 : i32
    %0 = arith.addi %arg1, %c1_i32 : i32
    %c1_i32_0 = arith.constant 1 : i32
    %1 = arith.muli %0, %c1_i32_0 : i32
    %c0_i32 = arith.constant 0 : i32
    %c0_i32_1 = arith.constant 0 : i32
    %c0_i32_2 = arith.constant 0 : i32
    return %arg0, %1, %c0_i32, %c0_i32_1 : i32, i32, i32, i32
  }
  func.func @transform_2(%arg0: i32, %arg1: i32) -> (i32, i32) {
    %c0_i32 = arith.constant 0 : i32
    %c0_i32_0 = arith.constant 0 : i32
    %c0_i32_1 = arith.constant 0 : i32
    return %c0_i32, %c0_i32_0 : i32, i32
  }
  func.func @transform_3(%arg0: i32, %arg1: i32) -> (i32, i32) {
    %c0_i32 = arith.constant 0 : i32
    %c0_i32_0 = arith.constant 0 : i32
    %c0_i32_1 = arith.constant 0 : i32
    return %c0_i32, %c0_i32_0 : i32, i32
  }
  func.func @transform_4(%arg0: i32, %arg1: i32) -> (i32, i32) {
    %c0_i32 = arith.constant 0 : i32
    %c0_i32_0 = arith.constant 0 : i32
    %c0_i32_1 = arith.constant 0 : i32
    return %c0_i32, %c0_i32_0 : i32, i32
  }
  func.func @transform_5(%arg0: i32, %arg1: i32) -> (i32, i32) {
    %c0_i32 = arith.constant 0 : i32
    %c0_i32_0 = arith.constant 0 : i32
    %c0_i32_1 = arith.constant 0 : i32
    return %c0_i32, %c0_i32_0 : i32, i32
  }
  func.func @transform_6(%arg0: i32, %arg1: i32) -> (i32, i32, i32, i32) {
    %c0_i32 = arith.constant 0 : i32
    %c0_i32_0 = arith.constant 0 : i32
    %c0_i32_1 = arith.constant 0 : i32
    return %arg0, %arg1, %c0_i32, %c0_i32_0 : i32, i32, i32, i32
  }
}

</mosaic_0001>

<llo_original>
// kernel: tpu_custom_call.1
$region0: #{tpu_custom_call.1}
  #allocation0 [shape = 'u32[]', space=smem, size = 0x4, offset = 0x4, fixed_abs, tag = 'smem constant byte address 0x4 - core index']
  #allocation1 [shape = 'u32[72,128]{1,0:T(1,128)}', space=vmem, size = 0x9000, scoped, tag = 'internal scratch']
  #allocation2 [shape = 'f32[8,24,128]{2,1,0:T(8,128)}', space=vmem, size = 0x18000, scoped, tag = 'scratch operand']
  %s0 = inlined_call_operand.hbm [shape: f32[2,24,24,128], index: 0, kind: input, shape index: {}]
  %s1 = inlined_call_operand.hbm [shape: f32[2,24,24,128], index: 1, kind: input, shape index: {}]
  %s2 = inlined_call_operand.hbm [shape: f32[9,128], index: 2, kind: input, shape index: {}]
  %s3 = inlined_call_operand.vmem [shape: f32[1,128], index: 3, kind: input, shape index: {}]
  %s4 = inlined_call_operand.hbm [shape: bf16[128,128], index: 4, kind: input, shape index: {}]
  %s5 = inlined_call_operand.vmem [shape: f32[1,128], index: 5, kind: input, shape index: {}]
  %s6 = inlined_call_operand.hbm [shape: f32[2,16,16,128], index: 6, kind: output, shape index: {}]
  %s7 = sld [smem:[#allocation0]]
  $region73: #{tpu_custom_call.1} parent=0
    _
  %s9 = ssub.s32 1, %s7
  %s10 = scalar_select 0, %s9, %s7
  $region1: #{tpu_custom_call.1} parent=0
    #allocation3 [shape = 'u8[196608]{0}', space=vmem, size = 0x30000, scoped, tag = 'input window, operand 0']
    #allocation4 [shape = 's32[2]{0}', space=sflag, size = 0x8, scoped, tag = 'scoped memory for tpu_custom_call.1']
    #allocation5 [shape = 's32[2]{0}', space=sflag, size = 0x8, scoped, tag = 'scoped memory for tpu_custom_call.1']
    #allocation6 [shape = 'u8[196608]{0}', space=vmem, size = 0x30000, scoped, tag = 'input window, operand 1']
    #allocation7 [shape = 's32[2]{0}', space=sflag, size = 0x8, scoped, tag = 'scoped memory for tpu_custom_call.1']
    #allocation8 [shape = 'u8[8192]{0}', space=vmem, size = 0x2000, scoped, tag = 'input window, operand 2, single buffered']
    #allocation9 [shape = 'u8[32768]{0}', space=vmem, size = 0x8000, scoped, tag = 'input window, operand 4, single buffered']
    #allocation10 [shape = 's32[1]{0}', space=sflag, size = 0x4, scoped, tag = 'scoped memory for tpu_custom_call.1']
    #allocation11 [shape = 'u8[131072]{0}', space=vmem, size = 0x20000, scoped, tag = 'output window, operand 0']
    %11 = vsyncpa [#allocation4], 0
    %s12 = scalar_lea.sflag [#allocation4], 1
    %13 = vsyncpa %s12, 0
    %14 = vsyncpa [#allocation7], 0
    %s15 = scalar_lea.sflag [#allocation7], 1
    %16 = vsyncpa %s15, 0
    %17 = vsyncpa [#allocation10], 0
    %18 = vsyncpa [#allocation5], 0
    %s19 = scalar_lea.sflag [#allocation5], 1
    %20 = vsyncpa %s19, 0
    loop: start=0, step=1, limit=6
    $region2: #{tpu_custom_call.1} parent=1 // loop_pre_header
      _
    $region3: #{tpu_custom_call.1} parent=1 // loop_header
      %s22 = sphi 0, %s26
      %p23 = scmp.ge.s32.totalorder %s22, 6
      %s29 = sphi 0, %s41
      %s30 = sphi 0, %s37
      %s31 = sphi 0, %s29
      %s32 = sphi 0, %s30
      %s33 = sphi 0, %s31
      %s34 = sphi 0, %s32
      %s46 = sphi 0, %s48
      %s49 = sphi 0, %s46
      %s50 = sphi 0, %s49
      %s66 = sphi 0, %s50
      %s76 = sphi 0, %s78
      %s79 = sphi 0, %s76
      %s80 = sphi 0, %s79
      %s96 = sphi 0, %s80
      %s100 = sphi 0, %s100
      %s102 = sphi 0, %s100
      %s103 = sphi 0, %s102
      %s117 = sphi 0, %s103
      %s121 = sphi 0, %s121
      %s123 = sphi 0, %s121
      %s124 = sphi 0, %s123
      %s138 = sphi 0, %s124
      %s142 = sphi 0, %s142
      %s144 = sphi 0, %s142
      %s145 = sphi 0, %s144
      %s159 = sphi 0, %s145
      %s163 = sphi 0, %s163
      %s165 = sphi 0, %s163
      %s166 = sphi 0, %s165
      %s180 = sphi 0, %s166
      %s188 = sphi 0, %s190
      %s191 = sphi 0, %s188
      %s192 = sphi 0, %s191
      %s208 = sphi 0, %s192
    $region4: #{tpu_custom_call.1} parent=1 // loop_header_branch
      %25 = sbr.rel (%p23) target = $region8
    $region5: #{tpu_custom_call.1} parent=1 // loop_body
      %s27 = ssub.s32 %s22, 1
      %s28 = ssub.s32 %s22, 2
      %s35 = sadd.s32 1, %s30
      %p36 = scmp.ge.s32.totalorder %s35, 2
      %s37 = scalar_select %p36, 0, %s35
      %s38 = sadd.s32 1, %s29
      %s39 = scalar_select %p36, %s38, %s29
      %p40 = scmp.ge.s32.totalorder %s39, 2
      %s41 = scalar_select %p40, 0, %s39
      %s42 = ssub.s32 %s29, %s41
      %s43 = ssub.s32 %s30, %s37
      %s44 = sor.u32 %s42, %s43
      %p45 = scmp.eq.s32.totalorder %s44, 0
      %s47 = sadd.s32 %s46, 1
      %s48 = scalar_select %p45, %s46, %s47
      %p51 = pneg %p45
      %p52 = scmp.eq.s32.totalorder %s22, 3
      %p53 = por %p51, %p52
      %p54 = scmp.ne.s32.totalorder %s46, %s49
      %p55 = scmp.eq.s32.totalorder %s22, 0
      %p56 = por %p54, %p55
      %p57 = scmp.ne.s32.totalorder %s46, %s49
      %p58 = scmp.eq.s32.totalorder %s27, 3
      %p59 = por %p57, %p58
      %p60 = scmp.ne.s32.totalorder %s49, %s50
      %p61 = scmp.eq.s32.totalorder %s27, 0
      %p62 = por %p60, %p61
      %p63 = scmp.ne.s32.totalorder %s49, %s50
      %p64 = scmp.eq.s32.totalorder %s28, 3
      %p65 = por %p63, %p64
      %p67 = scmp.ne.s32.totalorder %s50, %s66
      %p68 = scmp.eq.s32.totalorder %s28, 0
      %p69 = por %p67, %p68
      %s70 = sadd.s32 %s30, 1
      %s71 = sadd.s32 %s37, 1
      %s72 = ssub.s32 %s29, %s41
      %s73 = ssub.s32 %s70, %s71
      %s74 = sor.u32 %s72, %s73
      %p75 = scmp.eq.s32.totalorder %s74, 0
      %s77 = sadd.s32 %s76, 1
      %s78 = scalar_select %p75, %s76, %s77
      %p81 = pneg %p75
      %p82 = scmp.eq.s32.totalorder %s22, 3
      %p83 = por %p81, %p82
      %p84 = scmp.ne.s32.totalorder %s76, %s79
      %p85 = scmp.eq.s32.totalorder %s22, 0
      %p86 = por %p84, %p85
      %p87 = scmp.ne.s32.totalorder %s76, %s79
      %p88 = scmp.eq.s32.totalorder %s27, 3
      %p89 = por %p87, %p88
      %p90 = scmp.ne.s32.totalorder %s79, %s80
      %p91 = scmp.eq.s32.totalorder %s27, 0
      %p92 = por %p90, %p91
      %p93 = scmp.ne.s32.totalorder %s79, %s80
      %p94 = scmp.eq.s32.totalorder %s28, 3
      %p95 = por %p93, %p94
      %p97 = scmp.ne.s32.totalorder %s80, %s96
      %p98 = scmp.eq.s32.totalorder %s28, 0
      %p99 = por %p97, %p98
      %s101 = sadd.s32 %s100, 1
      %p104 = scmp.eq.s32.totalorder %s22, 3
      %p105 = scmp.ne.s32.totalorder %s100, %s102
      %p106 = scmp.eq.s32.totalorder %s22, 0
      %p107 = por %p105, %p106
      %p108 = scmp.ne.s32.totalorder %s100, %s102
      %p109 = scmp.eq.s32.totalorder %s27, 3
      %p110 = por %p108, %p109
      %p111 = scmp.ne.s32.totalorder %s102, %s103
      %p112 = scmp.eq.s32.totalorder %s27, 0
      %p113 = por %p111, %p112
      %p114 = scmp.ne.s32.totalorder %s102, %s103
      %p115 = scmp.eq.s32.totalorder %s28, 3
      %p116 = por %p114, %p115
      %p118 = scmp.ne.s32.totalorder %s103, %s117
      %p119 = scmp.eq.s32.totalorder %s28, 0
      %p120 = por %p118, %p119
      %s122 = sadd.s32 %s121, 1
      %p125 = scmp.eq.s32.totalorder %s22, 3
      %p126 = scmp.ne.s32.totalorder %s121, %s123
      %p127 = scmp.eq.s32.totalorder %s22, 0
      %p128 = por %p126, %p127
      %p129 = scmp.ne.s32.totalorder %s121, %s123
      %p130 = scmp.eq.s32.totalorder %s27, 3
      %p131 = por %p129, %p130
      %p132 = scmp.ne.s32.totalorder %s123, %s124
      %p133 = scmp.eq.s32.totalorder %s27, 0
      %p134 = por %p132, %p133
      %p135 = scmp.ne.s32.totalorder %s123, %s124
      %p136 = scmp.eq.s32.totalorder %s28, 3
      %p137 = por %p135, %p136
      %p139 = scmp.ne.s32.totalorder %s124, %s138
      %p140 = scmp.eq.s32.totalorder %s28, 0
      %p141 = por %p139, %p140
      %s143 = sadd.s32 %s142, 1
      %p146 = scmp.eq.s32.totalorder %s22, 3
      %p147 = scmp.ne.s32.totalorder %s142, %s144
      %p148 = scmp.eq.s32.totalorder %s22, 0
      %p149 = por %p147, %p148
      %p150 = scmp.ne.s32.totalorder %s142, %s144
      %p151 = scmp.eq.s32.totalorder %s27, 3
      %p152 = por %p150, %p151
      %p153 = scmp.ne.s32.totalorder %s144, %s145
      %p154 = scmp.eq.s32.totalorder %s27, 0
      %p155 = por %p153, %p154
      %p156 = scmp.ne.s32.totalorder %s144, %s145
      %p157 = scmp.eq.s32.totalorder %s28, 3
      %p158 = por %p156, %p157
      %p160 = scmp.ne.s32.totalorder %s145, %s159
      %p161 = scmp.eq.s32.totalorder %s28, 0
      %p162 = por %p160, %p161
      %s164 = sadd.s32 %s163, 1
      %p167 = scmp.eq.s32.totalorder %s22, 3
      %p168 = scmp.ne.s32.totalorder %s163, %s165
      %p169 = scmp.eq.s32.totalorder %s22, 0
      %p170 = por %p168, %p169
      %p171 = scmp.ne.s32.totalorder %s163, %s165
      %p172 = scmp.eq.s32.totalorder %s27, 3
      %p173 = por %p171, %p172
      %p174 = scmp.ne.s32.totalorder %s165, %s166
      %p175 = scmp.eq.s32.totalorder %s27, 0
      %p176 = por %p174, %p175
      %p177 = scmp.ne.s32.totalorder %s165, %s166
      %p178 = scmp.eq.s32.totalorder %s28, 3
      %p179 = por %p177, %p178
      %p181 = scmp.ne.s32.totalorder %s166, %s180
      %p182 = scmp.eq.s32.totalorder %s28, 0
      %p183 = por %p181, %p182
      %s184 = ssub.s32 %s29, %s41
      %s185 = ssub.s32 %s30, %s37
      %s186 = sor.u32 %s184, %s185
      %p187 = scmp.eq.s32.totalorder %s186, 0
      %s189 = sadd.s32 %s188, 1
      %s190 = scalar_select %p187, %s188, %s189
      %p193 = pneg %p187
      %p194 = scmp.eq.s32.totalorder %s22, 3
      %p195 = por %p193, %p194
      %p196 = scmp.ne.s32.totalorder %s188, %s191
      %p197 = scmp.eq.s32.totalorder %s22, 0
      %p198 = por %p196, %p197
      %p199 = scmp.ne.s32.totalorder %s188, %s191
      %p200 = scmp.eq.s32.totalorder %s27, 3
      %p201 = por %p199, %p200
      %p202 = scmp.ne.s32.totalorder %s191, %s192
      %p203 = scmp.eq.s32.totalorder %s27, 0
      %p204 = por %p202, %p203
      %p205 = scmp.ne.s32.totalorder %s191, %s192
      %p206 = scmp.eq.s32.totalorder %s28, 3
      %p207 = por %p205, %p206
      %p209 = scmp.ne.s32.totalorder %s192, %s208
      %p210 = scmp.eq.s32.totalorder %s28, 0
      %p211 = por %p209, %p210
      %p212 = scmp.le.s32.totalorder 1, %s22
      %p213 = scmp.lt.s32.totalorder %s22, 5
      %p214 = pnand %p212, %p213
      %p215 = pneg %p214
      // Predicated region
      $region9: #{tpu_custom_call.1} parent=5 // pred_check
        _
      $region10: #{tpu_custom_call.1} parent=5 // pred_check_branch
        %217 = sbr.rel (%p214) target = $region12
      $region11: #{tpu_custom_call.1} parent=5 // pred_region
        %s218 = ssub.s32 %s22, 1
        // Predicated region
        $region13: #{tpu_custom_call.1} parent=11 // pred_check
          %p219 = pneg %p113
        $region14: #{tpu_custom_call.1} parent=11 // pred_check_branch
          %221 = sbr.rel (%p219) target = $region16
        $region15: #{tpu_custom_call.1} parent=11 // pred_region
          %223 = vsyncadd [#allocation7], 0
          %s224 = sshll.u32 %s2, 4
          %s225 = int_to_ptr.hbm [resolvable:$true] %s224
          %s226 = sshll.u32 [#allocation8], 4
          %s227 = int_to_ptr.vmem [resolvable:$true] %s226
          %232 = dma.hbm_to_vmem [thread:$0]  %s225, 256, %s227, [#allocation7], 128, 128, 8
        $region16: #{tpu_custom_call.1} parent=11 // pred_fallthru
          _
        // Predicated region
        $region17: #{tpu_custom_call.1} parent=11 // pred_check
          %p233 = pneg %p134
        $region18: #{tpu_custom_call.1} parent=11 // pred_check_branch
          %235 = sbr.rel (%p233) target = $region20
        $region19: #{tpu_custom_call.1} parent=11 // pred_region
          _
        $region20: #{tpu_custom_call.1} parent=11 // pred_fallthru
          _
        // Predicated region
        $region21: #{tpu_custom_call.1} parent=11 // pred_check
          %p236 = pneg %p155
        $region22: #{tpu_custom_call.1} parent=11 // pred_check_branch
          %238 = sbr.rel (%p236) target = $region24
        $region23: #{tpu_custom_call.1} parent=11 // pred_region
          %240 = vsyncadd [#allocation10], 0
          %s241 = sshll.u32 %s4, 4
          %s242 = int_to_ptr.hbm [resolvable:$true] %s241
          %s243 = sshll.u32 [#allocation9], 4
          %s244 = int_to_ptr.vmem [resolvable:$true] %s243
          %249 = dma.hbm_to_vmem [thread:$0]  %s242, 1024, %s244, [#allocation10], 64, 64, 4
        $region24: #{tpu_custom_call.1} parent=11 // pred_fallthru
          _
        // Predicated region
        $region25: #{tpu_custom_call.1} parent=11 // pred_check
          %p250 = pneg %p176
        $region26: #{tpu_custom_call.1} parent=11 // pred_check_branch
          %252 = sbr.rel (%p250) target = $region28
        $region27: #{tpu_custom_call.1} parent=11 // pred_region
          _
        $region28: #{tpu_custom_call.1} parent=11 // pred_fallthru
          _
      $region12: #{tpu_custom_call.1} parent=5 // pred_fallthru
        _
      %p253 = scmp.lt.s32.totalorder %s22, 4
      // Predicated region
      $region29: #{tpu_custom_call.1} parent=5 // pred_check
        %p254 = pneg %p253
      $region30: #{tpu_custom_call.1} parent=5 // pred_check_branch
        %256 = sbr.rel (%p254) target = $region32
      $region31: #{tpu_custom_call.1} parent=5 // pred_region
        // Predicated region
        $region33: #{tpu_custom_call.1} parent=31 // pred_check
          %p257 = pneg %p56
        $region34: #{tpu_custom_call.1} parent=31 // pred_check_branch
          %259 = sbr.rel (%p257) target = $region36
        $region35: #{tpu_custom_call.1} parent=31 // pred_region
          %s260 = sand.u32 %s46, 1
          %s261 = scalar_lea.sflag [#allocation4], %s260
          %s262 = sand.u32 %s46, 1
          %s263 = smul.addr %s262, 192
          %s264 = scalar_lea.vmem [#allocation3], %s263
          %s265 = smul.u32 8, %s30
          %267 = vsyncadd %s261, 0
          %s268 = smul.addr %s265, 3
          %s269 = smul.addr %s29, 72
          %s270 = sadd.s32 %s268, %s269
          %s271 = smul.addr %s270, 8
          %s272 = scalar_lea.hbm %s0, %s271
          %s273 = sshll.u32 %s272, 4
          %s274 = int_to_ptr.hbm [resolvable:$true] %s273
          %s275 = sshll.u32 %s264, 4
          %s276 = int_to_ptr.vmem [resolvable:$true] %s275
          %281 = dma.hbm_to_vmem [thread:$0]  %s274, 3072, %s276, %s261, 128, 128, 8
        $region36: #{tpu_custom_call.1} parent=31 // pred_fallthru
          _
        // Predicated region
        $region37: #{tpu_custom_call.1} parent=31 // pred_check
          %p282 = pneg %p86
        $region38: #{tpu_custom_call.1} parent=31 // pred_check_branch
          %284 = sbr.rel (%p282) target = $region40
        $region39: #{tpu_custom_call.1} parent=31 // pred_region
          %s285 = sand.u32 %s22, 1
          %s286 = scalar_lea.sflag [#allocation7], %s285
          %s287 = sand.u32 %s76, 1
          %s288 = smul.addr %s287, 192
          %s289 = scalar_lea.vmem [#allocation6], %s288
          %s290 = sadd.s32 %s30, 1
          %s291 = smul.u32 8, %s290
          %293 = vsyncadd %s286, 0
          %s294 = smul.addr %s291, 3
          %s295 = smul.addr %s29, 72
          %s296 = sadd.s32 %s294, %s295
          %s297 = smul.addr %s296, 8
          %s298 = scalar_lea.hbm %s1, %s297
          %s299 = sshll.u32 %s298, 4
          %s300 = int_to_ptr.hbm [resolvable:$true] %s299
          %s301 = sshll.u32 %s289, 4
          %s302 = int_to_ptr.vmem [resolvable:$true] %s301
          %307 = dma.hbm_to_vmem [thread:$0]  %s300, 3072, %s302, %s286, 128, 128, 8
        $region40: #{tpu_custom_call.1} parent=31 // pred_fallthru
          _
      $region32: #{tpu_custom_call.1} parent=5 // pred_fallthru
        _
      %p308 = scmp.le.s32.totalorder 1, %s22
      %p309 = scmp.lt.s32.totalorder %s22, 5
      %p310 = pnand %p308, %p309
      %p311 = pneg %p310
      // Predicated region
      $region41: #{tpu_custom_call.1} parent=5 // pred_check
        _
      $region42: #{tpu_custom_call.1} parent=5 // pred_check_branch
        %313 = sbr.rel (%p310) target = $region44
      $region43: #{tpu_custom_call.1} parent=5 // pred_region
        %s314 = ssub.s32 %s22, 1
        %s315 = sand.u32 %s49, 1
        %s316 = scalar_lea.sflag [#allocation4], %s315
        %s317 = sand.u32 %s49, 1
        %s318 = smul.addr %s317, 192
        %s319 = scalar_lea.vmem [#allocation3], %s318
        // Predicated region
        $region45: #{tpu_custom_call.1} parent=43 // pred_check
          %p320 = pneg %p62
        $region46: #{tpu_custom_call.1} parent=43 // pred_check_branch
          %322 = sbr.rel (%p320) target = $region48
        $region47: #{tpu_custom_call.1} parent=43 // pred_region
          %324 = dma.done %s316, 3072
        $region48: #{tpu_custom_call.1} parent=43 // pred_fallthru
          _
        %s325 = sand.u32 %s27, 1
        %s326 = scalar_lea.sflag [#allocation7], %s325
        %s327 = sand.u32 %s79, 1
        %s328 = smul.addr %s327, 192
        %s329 = scalar_lea.vmem [#allocation6], %s328
        // Predicated region
        $region49: #{tpu_custom_call.1} parent=43 // pred_check
          %p330 = pneg %p92
        $region50: #{tpu_custom_call.1} parent=43 // pred_check_branch
          %332 = sbr.rel (%p330) target = $region52
        $region51: #{tpu_custom_call.1} parent=43 // pred_region
          %334 = dma.done %s326, 3072
        $region52: #{tpu_custom_call.1} parent=43 // pred_fallthru
          _
        // Predicated region
        $region53: #{tpu_custom_call.1} parent=43 // pred_check
          %p335 = pneg %p113
        $region54: #{tpu_custom_call.1} parent=43 // pred_check_branch
          %337 = sbr.rel (%p335) target = $region56
        $region55: #{tpu_custom_call.1} parent=43 // pred_region
          %339 = dma.done [#allocation7], 256
        $region56: #{tpu_custom_call.1} parent=43 // pred_fallthru
          _
        // Predicated region
        $region57: #{tpu_custom_call.1} parent=43 // pred_check
          %p340 = pneg %p155
        $region58: #{tpu_custom_call.1} parent=43 // pred_check_branch
          %342 = sbr.rel (%p340) target = $region60
        $region59: #{tpu_custom_call.1} parent=43 // pred_region
          %344 = dma.done [#allocation10], 1024
        $region60: #{tpu_custom_call.1} parent=43 // pred_fallthru
          _
        %s345 = sand.u32 %s49, 1
        %s346 = scalar_lea.sflag [#allocation4], %s345
        %s347 = sand.u32 %s49, 1
        %s348 = smul.addr %s347, 192
        %s349 = scalar_lea.vmem [#allocation3], %s348
        %p350 = pneg %p62
        %p351 = pneg %p59
        %s352 = sand.u32 %s27, 1
        %s353 = scalar_lea.sflag [#allocation7], %s352
        %s354 = sand.u32 %s79, 1
        %s355 = smul.addr %s354, 192
        %s356 = scalar_lea.vmem [#allocation6], %s355
        %p357 = pneg %p92
        %p358 = pneg %p89
        %p359 = pneg %p113
        %p360 = pneg %p110
        %p361 = pneg %p134
        %p362 = pneg %p131
        %p363 = pneg %p155
        %p364 = pneg %p152
        %p365 = pneg %p176
        %p366 = pneg %p173
        %p367 = pneg %p204
        %p368 = pneg %p201
        %s369 = sand.u32 %s191, 1
        %s370 = scalar_lea.sflag [#allocation5], %s369
        %s371 = sand.u32 %s191, 1
        %s372 = smul.addr %s371, 128
        %s373 = scalar_lea.vmem [#allocation11], %s372
        %s374 = smul.u32 8, %s32
        %s375 = sadd.s32 %s32, 1
        %s376 = smul.u32 8, %s375
        %s377 = smul.u32 8, %s32
        %v378 = vld [vmem:[%s319] sm:$0xff]
        %v379 = vld [vmem:[%s319 + $0x8] sm:$0xff]
        %v380 = vld [vmem:[%s319 + $0x18] sm:$0xff]
        %v381 = vld [vmem:[%s319 + $0x20] sm:$0xff]
        %v382 = vld [vmem:[%s319 + $0x30] sm:$0xff]
        %v383 = vld [vmem:[%s319 + $0x38] sm:$0xff]
        %v384 = vld [vmem:[%s319 + $0x48] sm:$0xff]
        %v385 = vld [vmem:[%s319 + $0x50] sm:$0xff]
        %v386 = vld [vmem:[%s319 + $0x60] sm:$0xff]
        %v387 = vld [vmem:[%s319 + $0x68] sm:$0xff]
        %v388 = vld [vmem:[%s319 + $0x78] sm:$0xff]
        %v389 = vld [vmem:[%s319 + $0x80] sm:$0xff]
        %v390 = vld [vmem:[#allocation8] sm:$0x1]
        %v391 = vperm.slane %v390, 0
        %v392 = vmul.f32 %v378, %v391
        %v393 = vmul.f32 %v379, %v391
        %v394 = vmul.f32 %v380, %v391
        %v395 = vmul.f32 %v381, %v391
        %v396 = vmul.f32 %v382, %v391
        %v397 = vmul.f32 %v383, %v391
        %v398 = vmul.f32 %v384, %v391
        %v399 = vmul.f32 %v385, %v391
        %v400 = vmul.f32 %v386, %v391
        %v401 = vmul.f32 %v387, %v391
        %v402 = vmul.f32 %v388, %v391
        %v403 = vmul.f32 %v389, %v391
        %v404 = vld [vmem:[%s319 + $0x1] sm:$0xff]
        %v405 = vld [vmem:[%s319 + $0x9] sm:$0xff]
        %v406 = vld [vmem:[%s319 + $0x19] sm:$0xff]
        %v407 = vld [vmem:[%s319 + $0x21] sm:$0xff]
        %v408 = vld [vmem:[%s319 + $0x31] sm:$0xff]
        %v409 = vld [vmem:[%s319 + $0x39] sm:$0xff]
        %v410 = vld [vmem:[%s319 + $0x49] sm:$0xff]
        %v411 = vld [vmem:[%s319 + $0x51] sm:$0xff]
        %v412 = vld [vmem:[%s319 + $0x61] sm:$0xff]
        %v413 = vld [vmem:[%s319 + $0x69] sm:$0xff]
        %v414 = vld [vmem:[%s319 + $0x79] sm:$0xff]
        %v415 = vld [vmem:[%s319 + $0x81] sm:$0xff]
        %v416 = vld [vmem:[#allocation8 + $0x1] sm:$0x1]
        %v417 = vperm.slane %v416, 0
        %v418 = vmul.f32 %v404, %v417
        %v419 = vmul.f32 %v405, %v417
        %v420 = vmul.f32 %v406, %v417
        %v421 = vmul.f32 %v407, %v417
        %v422 = vmul.f32 %v408, %v417
        %v423 = vmul.f32 %v409, %v417
        %v424 = vmul.f32 %v410, %v417
        %v425 = vmul.f32 %v411, %v417
        %v426 = vmul.f32 %v412, %v417
        %v427 = vmul.f32 %v413, %v417
        %v428 = vmul.f32 %v414, %v417
        %v429 = vmul.f32 %v415, %v417
        %v430 = vadd.f32 %v392, %v418
        %v431 = vadd.f32 %v393, %v419
        %v432 = vadd.f32 %v394, %v420
        %v433 = vadd.f32 %v395, %v421
        %v434 = vadd.f32 %v396, %v422
        %v435 = vadd.f32 %v397, %v423
        %v436 = vadd.f32 %v398, %v424
        %v437 = vadd.f32 %v399, %v425
        %v438 = vadd.f32 %v400, %v426
        %v439 = vadd.f32 %v401, %v427
        %v440 = vadd.f32 %v402, %v428
        %v441 = vadd.f32 %v403, %v429
        %v442 = vld [vmem:[%s319 + $0x2] sm:$0xff]
        %v443 = vld [vmem:[%s319 + $0xa] sm:$0xff]
        %v444 = vld [vmem:[%s319 + $0x1a] sm:$0xff]
        %v445 = vld [vmem:[%s319 + $0x22] sm:$0xff]
        %v446 = vld [vmem:[%s319 + $0x32] sm:$0xff]
        %v447 = vld [vmem:[%s319 + $0x3a] sm:$0xff]
        %v448 = vld [vmem:[%s319 + $0x4a] sm:$0xff]
        %v449 = vld [vmem:[%s319 + $0x52] sm:$0xff]
        %v450 = vld [vmem:[%s319 + $0x62] sm:$0xff]
        %v451 = vld [vmem:[%s319 + $0x6a] sm:$0xff]
        %v452 = vld [vmem:[%s319 + $0x7a] sm:$0xff]
        %v453 = vld [vmem:[%s319 + $0x82] sm:$0xff]
        %v454 = vld [vmem:[#allocation8 + $0x2] sm:$0x1]
        %v455 = vperm.slane %v454, 0
        %v456 = vmul.f32 %v442, %v455
        %v457 = vmul.f32 %v443, %v455
        %v458 = vmul.f32 %v444, %v455
        %v459 = vmul.f32 %v445, %v455
        %v460 = vmul.f32 %v446, %v455
        %v461 = vmul.f32 %v447, %v455
        %v462 = vmul.f32 %v448, %v455
        %v463 = vmul.f32 %v449, %v455
        %v464 = vmul.f32 %v450, %v455
        %v465 = vmul.f32 %v451, %v455
        %v466 = vmul.f32 %v452, %v455
        %v467 = vmul.f32 %v453, %v455
        %v468 = vadd.f32 %v430, %v456
        %v469 = vadd.f32 %v431, %v457
        %v470 = vadd.f32 %v432, %v458
        %v471 = vadd.f32 %v433, %v459
        %v472 = vadd.f32 %v434, %v460
        %v473 = vadd.f32 %v435, %v461
        %v474 = vadd.f32 %v436, %v462
        %v475 = vadd.f32 %v437, %v463
        %v476 = vadd.f32 %v438, %v464
        %v477 = vadd.f32 %v439, %v465
        %v478 = vadd.f32 %v440, %v466
        %v479 = vadd.f32 %v441, %v467
        %s480 = scalar_lea.vmem %s319, 24 [#allocation3]
        %v481 = vld [vmem:[%s480] sm:$0xff]
        %v482 = vld [vmem:[%s480 + $0x8] sm:$0xff]
        %v483 = vld [vmem:[%s480 + $0x18] sm:$0xff]
        %v484 = vld [vmem:[%s480 + $0x20] sm:$0xff]
        %v485 = vld [vmem:[%s480 + $0x30] sm:$0xff]
        %v486 = vld [vmem:[%s480 + $0x38] sm:$0xff]
        %v487 = vld [vmem:[%s480 + $0x48] sm:$0xff]
        %v488 = vld [vmem:[%s480 + $0x50] sm:$0xff]
        %v489 = vld [vmem:[%s480 + $0x60] sm:$0xff]
        %v490 = vld [vmem:[%s480 + $0x68] sm:$0xff]
        %v491 = vld [vmem:[%s480 + $0x78] sm:$0xff]
        %v492 = vld [vmem:[%s480 + $0x80] sm:$0xff]
        %v493 = vld [vmem:[#allocation8 + $0x3] sm:$0x1]
        %v494 = vperm.slane %v493, 0
        %v495 = vmul.f32 %v481, %v494
        %v496 = vmul.f32 %v482, %v494
        %v497 = vmul.f32 %v483, %v494
        %v498 = vmul.f32 %v484, %v494
        %v499 = vmul.f32 %v485, %v494
        %v500 = vmul.f32 %v486, %v494
        %v501 = vmul.f32 %v487, %v494
        %v502 = vmul.f32 %v488, %v494
        %v503 = vmul.f32 %v489, %v494
        %v504 = vmul.f32 %v490, %v494
        %v505 = vmul.f32 %v491, %v494
        %v506 = vmul.f32 %v492, %v494
        %v507 = vadd.f32 %v468, %v495
        %v508 = vadd.f32 %v469, %v496
        %v509 = vadd.f32 %v470, %v497
        %v510 = vadd.f32 %v471, %v498
        %v511 = vadd.f32 %v472, %v499
        %v512 = vadd.f32 %v473, %v500
        %v513 = vadd.f32 %v474, %v501
        %v514 = vadd.f32 %v475, %v502
        %v515 = vadd.f32 %v476, %v503
        %v516 = vadd.f32 %v477, %v504
        %v517 = vadd.f32 %v478, %v505
        %v518 = vadd.f32 %v479, %v506
        %v519 = vld [vmem:[%s480 + $0x1] sm:$0xff]
        %v520 = vld [vmem:[%s480 + $0x9] sm:$0xff]
        %v521 = vld [vmem:[%s480 + $0x19] sm:$0xff]
        %v522 = vld [vmem:[%s480 + $0x21] sm:$0xff]
        %v523 = vld [vmem:[%s480 + $0x31] sm:$0xff]
        %v524 = vld [vmem:[%s480 + $0x39] sm:$0xff]
        %v525 = vld [vmem:[%s480 + $0x49] sm:$0xff]
        %v526 = vld [vmem:[%s480 + $0x51] sm:$0xff]
        %v527 = vld [vmem:[%s480 + $0x61] sm:$0xff]
        %v528 = vld [vmem:[%s480 + $0x69] sm:$0xff]
        %v529 = vld [vmem:[%s480 + $0x79] sm:$0xff]
        %v530 = vld [vmem:[%s480 + $0x81] sm:$0xff]
        %v531 = vld [vmem:[#allocation8 + $0x4] sm:$0x1]
        %v532 = vperm.slane %v531, 0
        %v533 = vmul.f32 %v519, %v532
        %v534 = vmul.f32 %v520, %v532
        %v535 = vmul.f32 %v521, %v532
        %v536 = vmul.f32 %v522, %v532
        %v537 = vmul.f32 %v523, %v532
        %v538 = vmul.f32 %v524, %v532
        %v539 = vmul.f32 %v525, %v532
        %v540 = vmul.f32 %v526, %v532
        %v541 = vmul.f32 %v527, %v532
        %v542 = vmul.f32 %v528, %v532
        %v543 = vmul.f32 %v529, %v532
        %v544 = vmul.f32 %v530, %v532
        %v545 = vadd.f32 %v507, %v533
        %v546 = vadd.f32 %v508, %v534
        %v547 = vadd.f32 %v509, %v535
        %v548 = vadd.f32 %v510, %v536
        %v549 = vadd.f32 %v511, %v537
        %v550 = vadd.f32 %v512, %v538
        %v551 = vadd.f32 %v513, %v539
        %v552 = vadd.f32 %v514, %v540
        %v553 = vadd.f32 %v515, %v541
        %v554 = vadd.f32 %v516, %v542
        %v555 = vadd.f32 %v517, %v543
        %v556 = vadd.f32 %v518, %v544
        %v557 = vld [vmem:[%s480 + $0x2] sm:$0xff]
        %v558 = vld [vmem:[%s480 + $0xa] sm:$0xff]
        %v559 = vld [vmem:[%s480 + $0x1a] sm:$0xff]
        %v560 = vld [vmem:[%s480 + $0x22] sm:$0xff]
        %v561 = vld [vmem:[%s480 + $0x32] sm:$0xff]
        %v562 = vld [vmem:[%s480 + $0x3a] sm:$0xff]
        %v563 = vld [vmem:[%s480 + $0x4a] sm:$0xff]
        %v564 = vld [vmem:[%s480 + $0x52] sm:$0xff]
        %v565 = vld [vmem:[%s480 + $0x62] sm:$0xff]
        %v566 = vld [vmem:[%s480 + $0x6a] sm:$0xff]
        %v567 = vld [vmem:[%s480 + $0x7a] sm:$0xff]
        %v568 = vld [vmem:[%s480 + $0x82] sm:$0xff]
        %v569 = vld [vmem:[#allocation8 + $0x5] sm:$0x1]
        %v570 = vperm.slane %v569, 0
        %v571 = vmul.f32 %v557, %v570
        %v572 = vmul.f32 %v558, %v570
        %v573 = vmul.f32 %v559, %v570
        %v574 = vmul.f32 %v560, %v570
        %v575 = vmul.f32 %v561, %v570
        %v576 = vmul.f32 %v562, %v570
        %v577 = vmul.f32 %v563, %v570
        %v578 = vmul.f32 %v564, %v570
        %v579 = vmul.f32 %v565, %v570
        %v580 = vmul.f32 %v566, %v570
        %v581 = vmul.f32 %v567, %v570
        %v582 = vmul.f32 %v568, %v570
        %v583 = vadd.f32 %v545, %v571
        %v584 = vadd.f32 %v546, %v572
        %v585 = vadd.f32 %v547, %v573
        %v586 = vadd.f32 %v548, %v574
        %v587 = vadd.f32 %v549, %v575
        %v588 = vadd.f32 %v550, %v576
        %v589 = vadd.f32 %v551, %v577
        %v590 = vadd.f32 %v552, %v578
        %v591 = vadd.f32 %v553, %v579
        %v592 = vadd.f32 %v554, %v580
        %v593 = vadd.f32 %v555, %v581
        %v594 = vadd.f32 %v556, %v582
        %s595 = scalar_lea.vmem %s319, 48 [#allocation3]
        %v596 = vld [vmem:[%s595] sm:$0xff]
        %v597 = vld [vmem:[%s595 + $0x8] sm:$0xff]
        %v598 = vld [vmem:[%s595 + $0x18] sm:$0xff]
        %v599 = vld [vmem:[%s595 + $0x20] sm:$0xff]
        %v600 = vld [vmem:[%s595 + $0x30] sm:$0xff]
        %v601 = vld [vmem:[%s595 + $0x38] sm:$0xff]
        %v602 = vld [vmem:[%s595 + $0x48] sm:$0xff]
        %v603 = vld [vmem:[%s595 + $0x50] sm:$0xff]
        %v604 = vld [vmem:[%s595 + $0x60] sm:$0xff]
        %v605 = vld [vmem:[%s595 + $0x68] sm:$0xff]
        %v606 = vld [vmem:[%s595 + $0x78] sm:$0xff]
        %v607 = vld [vmem:[%s595 + $0x80] sm:$0xff]
        %v608 = vld [vmem:[#allocation8 + $0x6] sm:$0x1]
        %v609 = vperm.slane %v608, 0
        %v610 = vmul.f32 %v596, %v609
        %v611 = vmul.f32 %v597, %v609
        %v612 = vmul.f32 %v598, %v609
        %v613 = vmul.f32 %v599, %v609
        %v614 = vmul.f32 %v600, %v609
        %v615 = vmul.f32 %v601, %v609
        %v616 = vmul.f32 %v602, %v609
        %v617 = vmul.f32 %v603, %v609
        %v618 = vmul.f32 %v604, %v609
        %v619 = vmul.f32 %v605, %v609
        %v620 = vmul.f32 %v606, %v609
        %v621 = vmul.f32 %v607, %v609
        %v622 = vadd.f32 %v583, %v610
        %v623 = vadd.f32 %v584, %v611
        %v624 = vadd.f32 %v585, %v612
        %v625 = vadd.f32 %v586, %v613
        %v626 = vadd.f32 %v587, %v614
        %v627 = vadd.f32 %v588, %v615
        %v628 = vadd.f32 %v589, %v616
        %v629 = vadd.f32 %v590, %v617
        %v630 = vadd.f32 %v591, %v618
        %v631 = vadd.f32 %v592, %v619
        %v632 = vadd.f32 %v593, %v620
        %v633 = vadd.f32 %v594, %v621
        %v634 = vld [vmem:[%s595 + $0x1] sm:$0xff]
        %v635 = vld [vmem:[%s595 + $0x9] sm:$0xff]
        %v636 = vld [vmem:[%s595 + $0x19] sm:$0xff]
        %v637 = vld [vmem:[%s595 + $0x21] sm:$0xff]
        %v638 = vld [vmem:[%s595 + $0x31] sm:$0xff]
        %v639 = vld [vmem:[%s595 + $0x39] sm:$0xff]
        %v640 = vld [vmem:[%s595 + $0x49] sm:$0xff]
        %v641 = vld [vmem:[%s595 + $0x51] sm:$0xff]
        %v642 = vld [vmem:[%s595 + $0x61] sm:$0xff]
        %v643 = vld [vmem:[%s595 + $0x69] sm:$0xff]
        %v644 = vld [vmem:[%s595 + $0x79] sm:$0xff]
        %v645 = vld [vmem:[%s595 + $0x81] sm:$0xff]
        %v646 = vld [vmem:[#allocation8 + $0x7] sm:$0x1]
        %v647 = vperm.slane %v646, 0
        %v648 = vmul.f32 %v634, %v647
        %v649 = vmul.f32 %v635, %v647
        %v650 = vmul.f32 %v636, %v647
        %v651 = vmul.f32 %v637, %v647
        %v652 = vmul.f32 %v638, %v647
        %v653 = vmul.f32 %v639, %v647
        %v654 = vmul.f32 %v640, %v647
        %v655 = vmul.f32 %v641, %v647
        %v656 = vmul.f32 %v642, %v647
        %v657 = vmul.f32 %v643, %v647
        %v658 = vmul.f32 %v644, %v647
        %v659 = vmul.f32 %v645, %v647
        %v660 = vadd.f32 %v622, %v648
        %v661 = vadd.f32 %v623, %v649
        %v662 = vadd.f32 %v624, %v650
        %v663 = vadd.f32 %v625, %v651
        %v664 = vadd.f32 %v626, %v652
        %v665 = vadd.f32 %v627, %v653
        %v666 = vadd.f32 %v628, %v654
        %v667 = vadd.f32 %v629, %v655
        %v668 = vadd.f32 %v630, %v656
        %v669 = vadd.f32 %v631, %v657
        %v670 = vadd.f32 %v632, %v658
        %v671 = vadd.f32 %v633, %v659
        %v672 = vld [vmem:[%s595 + $0x2] sm:$0xff]
        %v673 = vld [vmem:[%s595 + $0xa] sm:$0xff]
        %v674 = vld [vmem:[%s595 + $0x1a] sm:$0xff]
        %v675 = vld [vmem:[%s595 + $0x22] sm:$0xff]
        %v676 = vld [vmem:[%s595 + $0x32] sm:$0xff]
        %v677 = vld [vmem:[%s595 + $0x3a] sm:$0xff]
        %v678 = vld [vmem:[%s595 + $0x4a] sm:$0xff]
        %v679 = vld [vmem:[%s595 + $0x52] sm:$0xff]
        %v680 = vld [vmem:[%s595 + $0x62] sm:$0xff]
        %v681 = vld [vmem:[%s595 + $0x6a] sm:$0xff]
        %v682 = vld [vmem:[%s595 + $0x7a] sm:$0xff]
        %v683 = vld [vmem:[%s595 + $0x82] sm:$0xff]
        %v684 = vld [vmem:[#allocation8 + $0x8] sm:$0x1]
        %v685 = vperm.slane %v684, 0
        %v686 = vmul.f32 %v672, %v685
        %v687 = vmul.f32 %v673, %v685
        %v688 = vmul.f32 %v674, %v685
        %v689 = vmul.f32 %v675, %v685
        %v690 = vmul.f32 %v676, %v685
        %v691 = vmul.f32 %v677, %v685
        %v692 = vmul.f32 %v678, %v685
        %v693 = vmul.f32 %v679, %v685
        %v694 = vmul.f32 %v680, %v685
        %v695 = vmul.f32 %v681, %v685
        %v696 = vmul.f32 %v682, %v685
        %v697 = vmul.f32 %v683, %v685
        %v698 = vadd.f32 %v660, %v686
        %v699 = vadd.f32 %v661, %v687
        %v700 = vadd.f32 %v662, %v688
        %v701 = vadd.f32 %v663, %v689
        %v702 = vadd.f32 %v664, %v690
        %v703 = vadd.f32 %v665, %v691
        %v704 = vadd.f32 %v666, %v692
        %v705 = vadd.f32 %v667, %v693
        %v706 = vadd.f32 %v668, %v694
        %v707 = vadd.f32 %v669, %v695
        %v708 = vadd.f32 %v670, %v696
        %v709 = vadd.f32 %v671, %v697
        %v710 = vld [vmem:[%s3] sm:$0x1]
        %v712 = vperm.slane %v710, 0
        %v714 = vadd.f32 %v698, %v712
        %v715 = vadd.f32 %v699, %v712
        %v716 = vadd.f32 %v700, %v712
        %v717 = vadd.f32 %v701, %v712
        %v718 = vadd.f32 %v702, %v712
        %v719 = vadd.f32 %v703, %v712
        %v720 = vadd.f32 %v704, %v712
        %v721 = vadd.f32 %v705, %v712
        %v722 = vadd.f32 %v706, %v712
        %v723 = vadd.f32 %v707, %v712
        %v724 = vadd.f32 %v708, %v712
        %v725 = vadd.f32 %v709, %v712
        %v726 = vmax.f32 %v714, 0.0
        %v727 = vmax.f32 %v715, 0.0
        %v728 = vmax.f32 %v716, 0.0
        %v729 = vmax.f32 %v717, 0.0
        %v730 = vmax.f32 %v718, 0.0
        %v731 = vmax.f32 %v719, 0.0
        %v732 = vmax.f32 %v720, 0.0
        %v733 = vmax.f32 %v721, 0.0
        %v734 = vmax.f32 %v722, 0.0
        %v735 = vmax.f32 %v723, 0.0
        %v736 = vmax.f32 %v724, 0.0
        %v737 = vmax.f32 %v725, 0.0
        %v738 = vpack.c.bf16 %v727, %v726
        %v739 = vpack.c.bf16 %v729, %v728
        %v740 = vpack.c.bf16 %v731, %v730
        %v741 = vpack.c.bf16 %v733, %v732
        %v742 = vpack.c.bf16 %v735, %v734
        %v743 = vpack.c.bf16 %v737, %v736
        %v744 = vld [vmem:[#allocation9] sm:$0xf]
        %v745 = vld [vmem:[#allocation9 + $0x4] sm:$0xf]
        %v746 = vld [vmem:[#allocation9 + $0x8] sm:$0xf]
        %v747 = vld [vmem:[#allocation9 + $0xc] sm:$0xf]
        %v748 = vld [vmem:[#allocation9 + $0x10] sm:$0xf]
        %v749 = vld [vmem:[#allocation9 + $0x14] sm:$0xf]
        %v750 = vld [vmem:[#allocation9 + $0x18] sm:$0xf]
        %v751 = vld [vmem:[#allocation9 + $0x1c] sm:$0xf]
        %v752 = vld [vmem:[#allocation9 + $0x20] sm:$0xf]
        %v753 = vld [vmem:[#allocation9 + $0x24] sm:$0xf]
        %v754 = vld [vmem:[#allocation9 + $0x28] sm:$0xf]
        %v755 = vld [vmem:[#allocation9 + $0x2c] sm:$0xf]
        %v756 = vld [vmem:[#allocation9 + $0x30] sm:$0xf]
        %v757 = vld [vmem:[#allocation9 + $0x34] sm:$0xf]
        %v758 = vld [vmem:[#allocation9 + $0x38] sm:$0xf]
        %v759 = vld [vmem:[#allocation9 + $0x3c] sm:$0xf]
        %v760 = vld [vmem:[%s5] sm:$0x1]
        %v762 = vperm.slane %v760, 0
        %v780 = vunpack.c.l.b16 %v744
        %v781 = vunpack.c.l.b16 %v745
        %v782 = vunpack.c.l.b16 %v746
        %v783 = vunpack.c.l.b16 %v747
        %v784 = vunpack.c.l.b16 %v748
        %v785 = vunpack.c.l.b16 %v749
        %v786 = vunpack.c.l.b16 %v750
        %v787 = vunpack.c.l.b16 %v751
        %v788 = vunpack.c.l.b16 %v752
        %v789 = vunpack.c.l.b16 %v753
        %v790 = vunpack.c.l.b16 %v754
        %v791 = vunpack.c.l.b16 %v755
        %v792 = vunpack.c.l.b16 %v756
        %v793 = vunpack.c.l.b16 %v757
        %v794 = vunpack.c.l.b16 %v758
        %v795 = vunpack.c.l.b16 %v759
        %v796 = vpack.c.b16 %v781, %v780
        %v797 = vpack.c.b16 %v783, %v782
        %v798 = vpack.c.b16 %v785, %v784
        %v799 = vpack.c.b16 %v787, %v786
        %v800 = vpack.c.b16 %v789, %v788
        %v801 = vpack.c.b16 %v791, %v790
        %v802 = vpack.c.b16 %v793, %v792
        %v803 = vpack.c.b16 %v795, %v794
        %812 = vmatpush.bf16.msra.mxu0 %v803
        %813 = vmatpush.bf16.msra.mxu0 %v802
        %814 = vmatpush.bf16.msra.mxu0 %v801
        %815 = vmatpush.bf16.msra.mxu0 %v800
        %816 = vmatpush.bf16.msra.mxu0 %v799
        %817 = vmatpush.bf16.msra.mxu0 %v798
        %818 = vmatpush.bf16.msra.mxu0 %v797
        %819 = vmatpush.bf16.msra.mxu0 %v796
        %820 = vmatmul.bf16.gmra.mxu0 %v738
        %v821 = vpop.f32.mrf.mxu0
        %v822 = vadd.f32 %v762, %v821
        %v823 = vpop.f32.mrf.mxu0
        %v824 = vadd.f32 %v762, %v823
        %825 = vmatmul.bf16.gmra.mxu0 %v739
        %v826 = vpop.f32.mrf.mxu0
        %v827 = vadd.f32 %v762, %v826
        %v828 = vpop.f32.mrf.mxu0
        %v829 = vadd.f32 %v762, %v828
        %830 = vmatmul.bf16.gmra.mxu0 %v740
        %v831 = vpop.f32.mrf.mxu0
        %v832 = vadd.f32 %v762, %v831
        %v833 = vpop.f32.mrf.mxu0
        %v834 = vadd.f32 %v762, %v833
        %835 = vmatmul.bf16.gmra.mxu0 %v741
        %v836 = vpop.f32.mrf.mxu0
        %v837 = vadd.f32 %v762, %v836
        %v838 = vpop.f32.mrf.mxu0
        %v839 = vadd.f32 %v762, %v838
        %840 = vmatmul.bf16.gmra.mxu0 %v742
        %v841 = vpop.f32.mrf.mxu0
        %v842 = vadd.f32 %v762, %v841
        %v843 = vpop.f32.mrf.mxu0
        %v844 = vadd.f32 %v762, %v843
        %845 = vmatmul.bf16.gmra.mxu0 %v743
        %v846 = vpop.f32.mrf.mxu0
        %v847 = vadd.f32 %v762, %v846
        %v848 = vpop.f32.mrf.mxu0
        %v849 = vadd.f32 %v762, %v848
        %850 = vdwg.mxu0
        %v851 = vmax.f32 %v822, 0.0
        %v852 = vmax.f32 %v824, 0.0
        %v853 = vmax.f32 %v827, 0.0
        %v854 = vmax.f32 %v829, 0.0
        %v855 = vmax.f32 %v832, 0.0
        %v856 = vmax.f32 %v834, 0.0
        %v857 = vmax.f32 %v837, 0.0
        %v858 = vmax.f32 %v839, 0.0
        %v859 = vmax.f32 %v842, 0.0
        %v860 = vmax.f32 %v844, 0.0
        %v861 = vmax.f32 %v847, 0.0
        %v862 = vmax.f32 %v849, 0.0
        %863 = vst [vmem:[%s373] sm:$0xff] %v851
        %864 = vst [vmem:[%s373 + $0x8] sm:$0xff] %v852
        %865 = vst [vmem:[%s373 + $0x10] sm:$0xff] %v853
        %866 = vst [vmem:[%s373 + $0x18] sm:$0xff] %v854
        %867 = vst [vmem:[%s373 + $0x20] sm:$0xff] %v855
        %868 = vst [vmem:[%s373 + $0x28] sm:$0xff] %v856
        %869 = vst [vmem:[%s373 + $0x30] sm:$0xff] %v857
        %870 = vst [vmem:[%s373 + $0x38] sm:$0xff] %v858
        %871 = vst [vmem:[%s373 + $0x40] sm:$0xff] %v859
        %872 = vst [vmem:[%s373 + $0x48] sm:$0xff] %v860
        %873 = vst [vmem:[%s373 + $0x50] sm:$0xff] %v861
        %874 = vst [vmem:[%s373 + $0x58] sm:$0xff] %v862
        %s875 = scalar_lea.vmem %s319, 144 [#allocation3]
        %v876 = vld [vmem:[%s875] sm:$0xff]
        %v877 = vld [vmem:[%s875 + $0x8] sm:$0xff]
        %v878 = vld [vmem:[%s875 + $0x10] sm:$0xff]
        %v879 = vld [vmem:[%s875 + $0x18] sm:$0xff]
        %v880 = vld [vmem:[%s875 + $0x20] sm:$0xff]
        %v881 = vld [vmem:[%s875 + $0x28] sm:$0xff]
        %882 = vst [vmem:[#allocation2] sm:$0xff] %v876
        %883 = vst [vmem:[#allocation2 + $0x8] sm:$0xff] %v877
        %884 = vst [vmem:[#allocation2 + $0x10] sm:$0xff] %v878
        %885 = vst [vmem:[#allocation2 + $0x18] sm:$0xff] %v879
        %886 = vst [vmem:[#allocation2 + $0x20] sm:$0xff] %v880
        %887 = vst [vmem:[#allocation2 + $0x28] sm:$0xff] %v881
        %v888 = vld [vmem:[%s329] sm:$0xff]
        %v889 = vld [vmem:[%s329 + $0x8] sm:$0xff]
        %v890 = vld [vmem:[%s329 + $0x10] sm:$0xff]
        %v891 = vld [vmem:[%s329 + $0x18] sm:$0xff]
        %v892 = vld [vmem:[%s329 + $0x20] sm:$0xff]
        %v893 = vld [vmem:[%s329 + $0x28] sm:$0xff]
        %s894 = scalar_lea.vmem [#allocation2], 48
        %895 = vst [vmem:[%s894] sm:$0xff] %v888
        %896 = vst [vmem:[%s894 + $0x8] sm:$0xff] %v889
        %897 = vst [vmem:[%s894 + $0x10] sm:$0xff] %v890
        %898 = vst [vmem:[%s894 + $0x18] sm:$0xff] %v891
        %899 = vst [vmem:[%s894 + $0x20] sm:$0xff] %v892
        %900 = vst [vmem:[%s894 + $0x28] sm:$0xff] %v893
        %v901 = vld [vmem:[#allocation2] sm:$0xff]
        %v902 = vld [vmem:[#allocation2 + $0x8] sm:$0xff]
        %v903 = vld [vmem:[#allocation2 + $0x18] sm:$0xff]
        %v904 = vld [vmem:[#allocation2 + $0x20] sm:$0xff]
        %v905 = vld [vmem:[#allocation8] sm:$0x1]
        %v906 = vperm.slane %v905, 0
        %v907 = vmul.f32 %v901, %v906
        %v908 = vmul.f32 %v902, %v906
        %v909 = vmul.f32 %v903, %v906
        %v910 = vmul.f32 %v904, %v906
        %v911 = vld [vmem:[#allocation2 + $0x1] sm:$0xff]
        %v912 = vld [vmem:[#allocation2 + $0x9] sm:$0xff]
        %v913 = vld [vmem:[#allocation2 + $0x19] sm:$0xff]
        %v914 = vld [vmem:[#allocation2 + $0x21] sm:$0xff]
        %v915 = vld [vmem:[#allocation8 + $0x1] sm:$0x1]
        %v916 = vperm.slane %v915, 0
        %v917 = vmul.f32 %v911, %v916
        %v918 = vmul.f32 %v912, %v916
        %v919 = vmul.f32 %v913, %v916
        %v920 = vmul.f32 %v914, %v916
        %v921 = vadd.f32 %v907, %v917
        %v922 = vadd.f32 %v908, %v918
        %v923 = vadd.f32 %v909, %v919
        %v924 = vadd.f32 %v910, %v920
        %v925 = vld [vmem:[#allocation2 + $0x2] sm:$0xff]
        %v926 = vld [vmem:[#allocation2 + $0xa] sm:$0xff]
        %v927 = vld [vmem:[#allocation2 + $0x1a] sm:$0xff]
        %v928 = vld [vmem:[#allocation2 + $0x22] sm:$0xff]
        %v929 = vld [vmem:[#allocation8 + $0x2] sm:$0x1]
        %v930 = vperm.slane %v929, 0
        %v931 = vmul.f32 %v925, %v930
        %v932 = vmul.f32 %v926, %v930
        %v933 = vmul.f32 %v927, %v930
        %v934 = vmul.f32 %v928, %v930
        %v935 = vadd.f32 %v921, %v931
        %v936 = vadd.f32 %v922, %v932
        %v937 = vadd.f32 %v923, %v933
        %v938 = vadd.f32 %v924, %v934
        %s939 = scalar_lea.vmem [#allocation2], 24
        %v940 = vld [vmem:[%s939] sm:$0xff]
        %v941 = vld [vmem:[%s939 + $0x8] sm:$0xff]
        %v942 = vld [vmem:[%s939 + $0x18] sm:$0xff]
        %v943 = vld [vmem:[%s939 + $0x20] sm:$0xff]
        %v944 = vld [vmem:[#allocation8 + $0x3] sm:$0x1]
        %v945 = vperm.slane %v944, 0
        %v946 = vmul.f32 %v940, %v945
        %v947 = vmul.f32 %v941, %v945
        %v948 = vmul.f32 %v942, %v945
        %v949 = vmul.f32 %v943, %v945
        %v950 = vadd.f32 %v935, %v946
        %v951 = vadd.f32 %v936, %v947
        %v952 = vadd.f32 %v937, %v948
        %v953 = vadd.f32 %v938, %v949
        %v954 = vld [vmem:[%s939 + $0x1] sm:$0xff]
        %v955 = vld [vmem:[%s939 + $0x9] sm:$0xff]
        %v956 = vld [vmem:[%s939 + $0x19] sm:$0xff]
        %v957 = vld [vmem:[%s939 + $0x21] sm:$0xff]
        %v958 = vld [vmem:[#allocation8 + $0x4] sm:$0x1]
        %v959 = vperm.slane %v958, 0
        %v960 = vmul.f32 %v954, %v959
        %v961 = vmul.f32 %v955, %v959
        %v962 = vmul.f32 %v956, %v959
        %v963 = vmul.f32 %v957, %v959
        %v964 = vadd.f32 %v950, %v960
        %v965 = vadd.f32 %v951, %v961
        %v966 = vadd.f32 %v952, %v962
        %v967 = vadd.f32 %v953, %v963
        %v968 = vld [vmem:[%s939 + $0x2] sm:$0xff]
        %v969 = vld [vmem:[%s939 + $0xa] sm:$0xff]
        %v970 = vld [vmem:[%s939 + $0x1a] sm:$0xff]
        %v971 = vld [vmem:[%s939 + $0x22] sm:$0xff]
        %v972 = vld [vmem:[#allocation8 + $0x5] sm:$0x1]
        %v973 = vperm.slane %v972, 0
        %v974 = vmul.f32 %v968, %v973
        %v975 = vmul.f32 %v969, %v973
        %v976 = vmul.f32 %v970, %v973
        %v977 = vmul.f32 %v971, %v973
        %v978 = vadd.f32 %v964, %v974
        %v979 = vadd.f32 %v965, %v975
        %v980 = vadd.f32 %v966, %v976
        %v981 = vadd.f32 %v967, %v977
        %v982 = vld [vmem:[%s894] sm:$0xff]
        %v983 = vld [vmem:[%s894 + $0x8] sm:$0xff]
        %v984 = vld [vmem:[%s894 + $0x18] sm:$0xff]
        %v985 = vld [vmem:[%s894 + $0x20] sm:$0xff]
        %v986 = vld [vmem:[#allocation8 + $0x6] sm:$0x1]
        %v987 = vperm.slane %v986, 0
        %v988 = vmul.f32 %v982, %v987
        %v989 = vmul.f32 %v983, %v987
        %v990 = vmul.f32 %v984, %v987
        %v991 = vmul.f32 %v985, %v987
        %v992 = vadd.f32 %v978, %v988
        %v993 = vadd.f32 %v979, %v989
        %v994 = vadd.f32 %v980, %v990
        %v995 = vadd.f32 %v981, %v991
        %v996 = vld [vmem:[%s894 + $0x1] sm:$0xff]
        %v997 = vld [vmem:[%s894 + $0x9] sm:$0xff]
        %v998 = vld [vmem:[%s894 + $0x19] sm:$0xff]
        %v999 = vld [vmem:[%s894 + $0x21] sm:$0xff]
        %v1000 = vld [vmem:[#allocation8 + $0x7] sm:$0x1]
        %v1001 = vperm.slane %v1000, 0
        %v1002 = vmul.f32 %v996, %v1001
        %v1003 = vmul.f32 %v997, %v1001
        %v1004 = vmul.f32 %v998, %v1001
        %v1005 = vmul.f32 %v999, %v1001
        %v1006 = vadd.f32 %v992, %v1002
        %v1007 = vadd.f32 %v993, %v1003
        %v1008 = vadd.f32 %v994, %v1004
        %v1009 = vadd.f32 %v995, %v1005
        %v1010 = vld [vmem:[%s894 + $0x2] sm:$0xff]
        %v1011 = vld [vmem:[%s894 + $0xa] sm:$0xff]
        %v1012 = vld [vmem:[%s894 + $0x1a] sm:$0xff]
        %v1013 = vld [vmem:[%s894 + $0x22] sm:$0xff]
        %v1014 = vld [vmem:[#allocation8 + $0x8] sm:$0x1]
        %v1015 = vperm.slane %v1014, 0
        %v1016 = vmul.f32 %v1010, %v1015
        %v1017 = vmul.f32 %v1011, %v1015
        %v1018 = vmul.f32 %v1012, %v1015
        %v1019 = vmul.f32 %v1013, %v1015
        %v1020 = vadd.f32 %v1006, %v1016
        %v1021 = vadd.f32 %v1007, %v1017
        %v1022 = vadd.f32 %v1008, %v1018
        %v1023 = vadd.f32 %v1009, %v1019
        %v1024 = vld [vmem:[%s3] sm:$0x1]
        %v1026 = vperm.slane %v1024, 0
        %v1028 = vadd.f32 %v1020, %v1026
        %v1029 = vadd.f32 %v1021, %v1026
        %v1030 = vadd.f32 %v1022, %v1026
        %v1031 = vadd.f32 %v1023, %v1026
        %v1032 = vmax.f32 %v1028, 0.0
        %v1033 = vmax.f32 %v1029, 0.0
        %v1034 = vmax.f32 %v1030, 0.0
        %v1035 = vmax.f32 %v1031, 0.0
        %v1036 = vpack.c.bf16 %v1033, %v1032
        %v1037 = vpack.c.bf16 %v1035, %v1034
        %v1038 = vld [vmem:[#allocation9] sm:$0xf]
        %v1039 = vld [vmem:[#allocation9 + $0x4] sm:$0xf]
        %v1040 = vld [vmem:[#allocation9 + $0x8] sm:$0xf]
        %v1041 = vld [vmem:[#allocation9 + $0xc] sm:$0xf]
        %v1042 = vld [vmem:[#allocation9 + $0x10] sm:$0xf]
        %v1043 = vld [vmem:[#allocation9 + $0x14] sm:$0xf]
        %v1044 = vld [vmem:[#allocation9 + $0x18] sm:$0xf]
        %v1045 = vld [vmem:[#allocation9 + $0x1c] sm:$0xf]
        %v1046 = vld [vmem:[#allocation9 + $0x20] sm:$0xf]
        %v1047 = vld [vmem:[#allocation9 + $0x24] sm:$0xf]
        %v1048 = vld [vmem:[#allocation9 + $0x28] sm:$0xf]
        %v1049 = vld [vmem:[#allocation9 + $0x2c] sm:$0xf]
        %v1050 = vld [vmem:[#allocation9 + $0x30] sm:$0xf]
        %v1051 = vld [vmem:[#allocation9 + $0x34] sm:$0xf]
        %v1052 = vld [vmem:[#allocation9 + $0x38] sm:$0xf]
        %v1053 = vld [vmem:[#allocation9 + $0x3c] sm:$0xf]
        %v1054 = vld [vmem:[%s5] sm:$0x1]
        %v1056 = vperm.slane %v1054, 0
        %v1074 = vunpack.c.l.b16 %v1038
        %v1075 = vunpack.c.l.b16 %v1039
        %v1076 = vunpack.c.l.b16 %v1040
        %v1077 = vunpack.c.l.b16 %v1041
        %v1078 = vunpack.c.l.b16 %v1042
        %v1079 = vunpack.c.l.b16 %v1043
        %v1080 = vunpack.c.l.b16 %v1044
        %v1081 = vunpack.c.l.b16 %v1045
        %v1082 = vunpack.c.l.b16 %v1046
        %v1083 = vunpack.c.l.b16 %v1047
        %v1084 = vunpack.c.l.b16 %v1048
        %v1085 = vunpack.c.l.b16 %v1049
        %v1086 = vunpack.c.l.b16 %v1050
        %v1087 = vunpack.c.l.b16 %v1051
        %v1088 = vunpack.c.l.b16 %v1052
        %v1089 = vunpack.c.l.b16 %v1053
        %v1090 = vpack.c.b16 %v1075, %v1074
        %v1091 = vpack.c.b16 %v1077, %v1076
        %v1092 = vpack.c.b16 %v1079, %v1078
        %v1093 = vpack.c.b16 %v1081, %v1080
        %v1094 = vpack.c.b16 %v1083, %v1082
        %v1095 = vpack.c.b16 %v1085, %v1084
        %v1096 = vpack.c.b16 %v1087, %v1086
        %v1097 = vpack.c.b16 %v1089, %v1088
        %1106 = vmatpush.bf16.msra.mxu0 %v1097
        %1107 = vmatpush.bf16.msra.mxu0 %v1096
        %1108 = vmatpush.bf16.msra.mxu0 %v1095
        %1109 = vmatpush.bf16.msra.mxu0 %v1094
        %1110 = vmatpush.bf16.msra.mxu0 %v1093
        %1111 = vmatpush.bf16.msra.mxu0 %v1092
        %1112 = vmatpush.bf16.msra.mxu0 %v1091
        %1113 = vmatpush.bf16.msra.mxu0 %v1090
        %1114 = vmatmul.bf16.gmra.mxu0 %v1036
        %v1115 = vpop.f32.mrf.mxu0
        %v1116 = vadd.f32 %v1056, %v1115
        %v1117 = vpop.f32.mrf.mxu0
        %v1118 = vadd.f32 %v1056, %v1117
        %1119 = vmatmul.bf16.gmra.mxu0 %v1037
        %v1120 = vpop.f32.mrf.mxu0
        %v1121 = vadd.f32 %v1056, %v1120
        %v1122 = vpop.f32.mrf.mxu0
        %v1123 = vadd.f32 %v1056, %v1122
        %1124 = vdwg.mxu0
        %v1125 = vmax.f32 %v1116, 0.0
        %v1126 = vmax.f32 %v1118, 0.0
        %v1127 = vmax.f32 %v1121, 0.0
        %v1128 = vmax.f32 %v1123, 0.0
        %s1129 = scalar_lea.vmem %s373, 96 [#allocation11]
        %1130 = vst [vmem:[%s1129] sm:$0xff] %v1125
        %1131 = vst [vmem:[%s1129 + $0x8] sm:$0xff] %v1126
        %1132 = vst [vmem:[%s1129 + $0x10] sm:$0xff] %v1127
        %1133 = vst [vmem:[%s1129 + $0x18] sm:$0xff] %v1128
        %s1134 = sand.u32 %s191, 1
        %s1135 = scalar_lea.sflag [#allocation5], %s1134
        %s1136 = sand.u32 %s191, 1
        %s1137 = smul.addr %s1136, 128
        %s1138 = scalar_lea.vmem [#allocation11], %s1137
        // Predicated region
        $region61: #{tpu_custom_call.1} parent=43 // pred_check
          %p1139 = pneg %p201
        $region62: #{tpu_custom_call.1} parent=43 // pred_check_branch
          %1141 = sbr.rel (%p1139) target = $region64
        $region63: #{tpu_custom_call.1} parent=43 // pred_region
          %s1142 = smul.u32 8, %s32
          %1144 = vsyncadd %s1135, 0
          %s1145 = smul.addr %s1142, 2
          %s1146 = smul.addr %s31, 32
          %s1147 = sadd.s32 %s1145, %s1146
          %s1148 = smul.addr %s1147, 8
          %s1149 = scalar_lea.hbm %s6, %s1148
          %s1150 = sshll.u32 %s1138, 4
          %s1151 = int_to_ptr.vmem [resolvable:$true] %s1150
          %s1152 = sshll.u32 %s1149, 4
          %s1153 = int_to_ptr.hbm [resolvable:$true] %s1152
          %1158 = dma.vmem_to_hbm [thread:$0]  %s1151, 2048, %s1153, %s1135, 128, 128, 8
        $region64: #{tpu_custom_call.1} parent=43 // pred_fallthru
          _
      $region44: #{tpu_custom_call.1} parent=5 // pred_fallthru
        _
      %p1159 = scmp.le.s32.totalorder 2, %s22
      // Predicated region
      $region65: #{tpu_custom_call.1} parent=5 // pred_check
        %p1160 = pneg %p1159
      $region66: #{tpu_custom_call.1} parent=5 // pred_check_branch
        %1162 = sbr.rel (%p1160) target = $region68
      $region67: #{tpu_custom_call.1} parent=5 // pred_region
        %s1163 = ssub.s32 %s22, 2
        // Predicated region
        $region69: #{tpu_custom_call.1} parent=67 // pred_check
          %p1164 = pneg %p207
        $region70: #{tpu_custom_call.1} parent=67 // pred_check_branch
          %1166 = sbr.rel (%p1164) target = $region72
        $region71: #{tpu_custom_call.1} parent=67 // pred_region
          %s1167 = sand.u32 %s192, 1
          %s1168 = scalar_lea.sflag [#allocation5], %s1167
          %s1169 = sand.u32 %s192, 1
          %s1170 = smul.addr %s1169, 128
          %s1171 = scalar_lea.vmem [#allocation11], %s1170
          %1173 = dma.done %s1168, 2048
        $region72: #{tpu_custom_call.1} parent=67 // pred_fallthru
          _
      $region68: #{tpu_custom_call.1} parent=5 // pred_fallthru
        _
    $region6: #{tpu_custom_call.1} parent=1 // loop_footer
      %s26 = sadd.s32 1, %s22
    $region7: #{tpu_custom_call.1} parent=1 // loop_footer_branch
      %21 = sbr.rel target = $region3
    $region8: #{tpu_custom_call.1} parent=1 // loop_exit
      _
    %1174 = vsyncpa [#allocation4], 1
    %s1175 = scalar_lea.sflag [#allocation4], 1
    %1176 = vsyncpa %s1175, 1
    %1177 = vsyncpa [#allocation7], 1
    %s1178 = scalar_lea.sflag [#allocation7], 1
    %1179 = vsyncpa %s1178, 1
    %1180 = vsyncpa [#allocation10], 1
    %1181 = vsyncpa [#allocation5], 1
    %s1182 = scalar_lea.sflag [#allocation5], 1
    %1183 = vsyncpa %s1182, 1

</llo_original>
